<compile_context>
chip_gen: v6e
topology: v6e:2x2x1
jax: 0.10.0
libtpu: 0.0.40
codegen_flags: <defaults>
</compile_context>

<pallas_src>
import functools
import math

import jax
import jax.numpy as jnp
from jax.experimental import pallas as pl
from jax.experimental.pallas import tpu as pltpu


def _attn_kernel(q_ref, k_ref, v_ref, a_ref, out_ref, qs_ref, *,
                 inv_scale, scale_e):
    # q_ref: (bt, Sq, D) f32   k_ref: (bt, tk, D) bf16   v_ref: (bt, tk, Dv) bf16
    # a_ref: (Sq, tk) bf16     out_ref: (bt, Sq, Dv) f32 (resident accumulator)
    # qs_ref: (bt, Sq, D) bf16 scratch holding the pre-scaled q for this b block.
    kid = pl.program_id(1)

    @pl.when(kid == 0)
    def _init():
        out_ref[...] = jnp.zeros_like(out_ref)
        # Hoisted: fold 1/sqrt(D) into q once per batch block (f32 math, one
        # cast), instead of re-doing the bt*Sq*D multiply on every Sk step.
        qs_ref[...] = (q_ref[...] * inv_scale).astype(qs_ref.dtype)

    q = qs_ref[...]
    k = k_ref[...]
    v = v_ref[...]

    # q @ k^T without an explicit transpose: contract on D, batch on bt.
    s = jax.lax.dot_general(
        q, k,
        dimension_numbers=(((2,), (2,)), ((0,), (0,))),
        preferred_element_type=jnp.float32,
    )                                                  # (bt, Sq, tk) f32
    s = s + a_ref[...][None].astype(jnp.float32)

    # Softmax over the Sq axis (dim=-2), f32 math. Each Sk column is complete
    # within this tile, so max/denom are exact (no cross-tile carry needed).
    m = jnp.max(s, axis=1, keepdims=True)              # (bt, 1, tk)
    e = jnp.exp(s - m)                                 # (bt, Sq, tk), in (0, 1]
    denom = jnp.sum(e, axis=1, keepdims=True)          # (bt, 1, tk), >= 1
    inv_denom = pl.reciprocal(denom, approx=True)      # EUP; <= 1

    if scale_e:
        # Normalize the probabilities (Sq*tk elems) — cheaper when Sq <= Dv.
        p = (e * inv_denom).astype(v.dtype)
        vv = v
    else:
        # Normalize the V rows instead (tk*Dv elems) — identical math since the
        # denominator is per-key:  sum_k (e/d_k) v_k == sum_k e (v_k/d_k).
        p = e.astype(v.dtype)
        inv_denom_t = jnp.transpose(inv_denom, (0, 2, 1))   # (bt, tk, 1)
        vv = (v.astype(jnp.float32) * inv_denom_t).astype(v.dtype)

    # Accumulate attn @ v directly into the resident f32 output block.
    out_ref[...] += jax.lax.dot_general(
        p, vv,
        dimension_numbers=(((2,), (1,)), ((0,), (0,))),
        preferred_element_type=jnp.float32,
    )


def _tpu_vmem_capacity_bytes():
    try:
        info = pltpu.get_tpu_info()
        cap = getattr(info, "vmem_capacity_bytes", None)
        if cap:
            return int(cap)
    except Exception:
        pass
    return 64 * 1024 * 1024  # conservative (v7x-class per-TC VMEM)


def _vmem_estimate(bt, tk, sq, d, dv, stream_itemsize, kv_buffers=2):
    q_in = 2 * bt * sq * d * 4                       # f32 q blocks (dbl-buffered)
    qs = bt * sq * d * stream_itemsize               # scaled-q scratch
    k_in = kv_buffers * bt * tk * d * stream_itemsize
    v_in = kv_buffers * bt * tk * dv * stream_itemsize
    a_in = 2 * sq * tk * stream_itemsize
    o_out = 2 * bt * sq * dv * 4
    interm = 3 * bt * sq * tk * 4                    # s / e / p f32-class temps
    return q_in + qs + k_in + v_in + a_in + o_out + interm


def _pick_sk_tile(sk, max_tile):
    if sk <= max_tile:
        return sk
    # Prefer multiples of 256 (MXU N width on v6e/v7x), then 128.
    for quantum in (256, 128):
        t = (max_tile // quantum) * quantum
        while t >= quantum:
            if sk % t == 0:
                return t
            t -= quantum
    return sk  # fall back to the whole axis if no 128-multiple divisor exists


def _pick_batch_tile(batch, sq, d, dv, tk, stream_itemsize, budget,
                     prefer_even_nb, kv_buffers):
    cands = [c for c in range(min(batch, 8), 0, -1)
             if batch % c == 0
             and _vmem_estimate(c, tk, sq, d, dv, stream_itemsize,
                                kv_buffers) <= budget]
    if not cands:
        return 1
    if prefer_even_nb and batch >= 2:
        even = [c for c in cands if (batch // c) % 2 == 0]
        if even:
            return even[0]   # keep both TensorCores busy on v7x-class parts
    return cands[0]


def model_forward(q, k, v, a, *, sk_tile=None, batch_tile=None,
                  stream_dtype=jnp.bfloat16, kv_buffers=2):
    B, Sq, D = q.shape
    Sk = k.shape[1]
    Dv = v.shape[2]
    assert k.shape == (B, Sk, D)
    assert v.shape == (B, Sk, Dv)
    assert a.shape == (Sq, Sk)

    inv_scale = 1.0 / math.sqrt(float(D))  # torch intent: scale = sqrt(d_k)
    stream_itemsize = jnp.dtype(stream_dtype).itemsize

    # Generation-aware VMEM sizing.
    vmem_cap = _tpu_vmem_capacity_bytes()
    small_vmem = vmem_cap <= (80 << 20)                 # v7x-class (64 MiB/TC)
    budget = (20 << 20) if small_vmem else (48 << 20)
    vmem_limit_cap = (40 << 20) if small_vmem else (64 << 20)
    max_sk_tile = 512 if small_vmem else 1024

    tk = sk_tile if sk_tile is not None else _pick_sk_tile(Sk, max_sk_tile)
    assert Sk % tk == 0 and (tk == Sk or tk % 128 == 0), "invalid Sk tile"

    bt = (batch_tile if batch_tile is not None
          else _pick_batch_tile(B, Sq, D, Dv, tk, stream_itemsize, budget,
                                prefer_even_nb=small_vmem,
                                kv_buffers=kv_buffers))
    assert B % bt == 0, "batch tile must divide batch"

    nb, nk = B // bt, Sk // tk
    est = _vmem_estimate(bt, tk, Sq, D, Dv, stream_itemsize, kv_buffers)
    vmem_limit = int(min(max(est + (8 << 20), 16 << 20), vmem_limit_cap))

    # Stream K/V/a in bf16; q stays f32 (resident, scaled once in-kernel).
    k_s = k.astype(stream_dtype)
    v_s = v.astype(stream_dtype)
    a_s = a.astype(stream_dtype)

    # Normalize the smaller operand (see kernel): e when Sq <= Dv, else v rows.
    scale_e = Sq <= Dv

    kv_spec_kwargs = {}
    if kv_buffers != 2:
        kv_spec_kwargs["pipeline_mode"] = pl.Buffered(kv_buffers)

    kernel = functools.partial(_attn_kernel, inv_scale=inv_scale,
                               scale_e=scale_e)

    # TODO(synk): very long Sq would additionally need an online softmax over an
    # Sq grid axis; Sq is kept whole here (fine for typical query-block sizes).
    out = pl.pallas_call(
        kernel,
        out_shape=jax.ShapeDtypeStruct((B, Sq, Dv), jnp.float32),
        grid=(nb, nk),
        in_specs=[
            pl.BlockSpec((bt, Sq, D), lambda b, kk: (b, 0, 0)),
            pl.BlockSpec((bt, tk, D), lambda b, kk: (b, kk, 0),
                         **kv_spec_kwargs),
            pl.BlockSpec((bt, tk, Dv), lambda b, kk: (b, kk, 0),
                         **kv_spec_kwargs),
            pl.BlockSpec((Sq, tk), lambda b, kk: (0, kk)),
        ],
        out_specs=pl.BlockSpec((bt, Sq, Dv), lambda b, kk: (b, 0, 0)),  # resident over kk
        scratch_shapes=[pltpu.VMEM((bt, Sq, D), stream_dtype)],
        compiler_params=pltpu.CompilerParams(
            dimension_semantics=("parallel", "arbitrary"),
            vmem_limit_bytes=vmem_limit,
        ),
    )(q, k_s, v_s, a_s)

    # attn_w.sum(): softmax over dim=-2 (Sq) => every (b, k) column sums to 1,
    # so the total is exactly B * Sk (up to float rounding in the reference).
    attn_sum = jnp.asarray(B * Sk, dtype=jnp.float32)
    return out, attn_sum


if __name__ == "__main__":
    key = jax.random.PRNGKey(0)

    def reference(q, k, v, a):
        scale = math.sqrt(float(q.shape[-1]))
        qk = jnp.einsum("bqd,bkd->bqk", q, k) / scale + a
        attn = jax.nn.softmax(qk, axis=-2)
        return jnp.einsum("bqk,bkv->bqv", attn, v), attn.sum()

    # Two small configs: one exercises the "scale e" path (Sq <= Dv), the other
    # the "scale v rows" path (Sq > Dv); both exercise Sk tiling + batch blocks.
    configs = [
        # (B, Sq, Sk, D, Dv, sk_tile, batch_tile)
        (4, 16, 256, 64, 32, 128, 2),
        (2, 64, 256, 64, 32, 128, None),
    ]

    ok = True
    for (B, Sq, Sk, D, Dv, tkk, btt) in configs:
        kq, kk_, kv, ka, key = jax.random.split(key, 5)
        q = jax.random.normal(kq, (B, Sq, D), jnp.float32)
        k = jax.random.normal(kk_, (B, Sk, D), jnp.float32)
        v = jax.random.normal(kv, (B, Sk, Dv), jnp.float32)
        a = jax.random.normal(ka, (Sq, Sk), jnp.float32)

        out, attn_sum = model_forward(q, k, v, a, sk_tile=tkk, batch_tile=btt)
        jax.block_until_ready((out, attn_sum))

        out_ref, sum_ref = reference(q, k, v, a)
        # bf16 K/V/p streaming => looser tolerance vs the pure-f32 reference.
        assert jnp.allclose(out, out_ref, atol=5e-2, rtol=5e-2), (
            "max abs err = %g" % float(jnp.max(jnp.abs(out - out_ref))))
        assert abs(float(attn_sum) - float(sum_ref)) <= 1e-2 * max(1.0, float(sum_ref)), (
            float(attn_sum), float(sum_ref))

    if ok:
        print("KERNEL_OK")
</pallas_src>

<mosaic_0001>
module attributes {stable_mosaic.version = 11 : i64} {
  func.func @_attn_kernel(%arg0: i32, %arg1: i32, %arg2: memref<2x16x64xf32, #tpu.memory_space<vmem>>, %arg3: memref<2x128x64xbf16, #tpu.memory_space<vmem>>, %arg4: memref<2x128x32xbf16, #tpu.memory_space<vmem>>, %arg5: memref<16x128xbf16, #tpu.memory_space<vmem>>, %arg6: memref<2x16x32xf32, #tpu.memory_space<vmem>>, %arg7: memref<2x16x64xbf16, #tpu.memory_space<vmem>>) attributes {dimension_semantics = [#tpu.dimension_semantics<parallel>, #tpu.dimension_semantics<arbitrary>], iteration_bounds = array<i64: 2, 2>, scalar_prefetch = 0 : i64, scratch_operands = 1 : i64, tpu.core_type = #tpu.core_type<tc>, window_params = [{transform_indices = @transform_0, window_bounds = array<i64: 2, 16, 64>}, {transform_indices = @transform_1, window_bounds = array<i64: 2, 128, 64>}, {transform_indices = @transform_2, window_bounds = array<i64: 2, 128, 32>}, {transform_indices = @transform_3, window_bounds = array<i64: 16, 128>}, {transform_indices = @transform_4, window_bounds = array<i64: 2, 16, 32>}]} {
    %c0_i32 = arith.constant 0 : i32
    %0 = arith.cmpi eq, %arg1, %c0_i32 : i32
    %1 = arith.extui %0 : i1 to i32
    %c0_i32_0 = arith.constant 0 : i32
    %2 = arith.cmpi ne, %1, %c0_i32_0 : i32
    scf.if %2 {
      %cst_20 = arith.constant 0.000000e+00 : f32
      %27 = vector.broadcast %cst_20 : f32 to vector<2x16x32xf32>
      %c0_21 = arith.constant 0 : index
      %c0_22 = arith.constant 0 : index
      %c0_23 = arith.constant 0 : index
      %28 = vector.load %arg6[%c0_21, %c0_22, %c0_23] : memref<2x16x32xf32, #tpu.memory_space<vmem>>, vector<2x16x32xf32>
      tpu.vector_store %arg6[%c0_21, %c0_22, %c0_23], %27 {strides = array<i32>} : memref<2x16x32xf32, #tpu.memory_space<vmem>>, vector<2x16x32xf32>,
      %c0_24 = arith.constant 0 : index
      %c0_25 = arith.constant 0 : index
      %c0_26 = arith.constant 0 : index
      %29 = vector.load %arg2[%c0_24, %c0_25, %c0_26] : memref<2x16x64xf32, #tpu.memory_space<vmem>>, vector<2x16x64xf32>
      %cst_27 = arith.constant 1.250000e-01 : f32
      %30 = vector.broadcast %cst_27 : f32 to vector<2x16x64xf32>
      %31 = arith.mulf %29, %30 : vector<2x16x64xf32>
      %32 = arith.truncf %31 : vector<2x16x64xf32> to vector<2x16x64xbf16>
      %c0_28 = arith.constant 0 : index
      %c0_29 = arith.constant 0 : index
      %c0_30 = arith.constant 0 : index
      %33 = vector.load %arg7[%c0_28, %c0_29, %c0_30] : memref<2x16x64xbf16, #tpu.memory_space<vmem>>, vector<2x16x64xbf16>
      tpu.vector_store %arg7[%c0_28, %c0_29, %c0_30], %32 {strides = array<i32>} : memref<2x16x64xbf16, #tpu.memory_space<vmem>>, vector<2x16x64xbf16>,
    } else {
    }
    %c0 = arith.constant 0 : index
    %c0_1 = arith.constant 0 : index
    %c0_2 = arith.constant 0 : index
    %3 = vector.load %arg7[%c0, %c0_1, %c0_2] : memref<2x16x64xbf16, #tpu.memory_space<vmem>>, vector<2x16x64xbf16>
    %c0_3 = arith.constant 0 : index
    %c0_4 = arith.constant 0 : index
    %c0_5 = arith.constant 0 : index
    %4 = vector.load %arg3[%c0_3, %c0_4, %c0_5] : memref<2x128x64xbf16, #tpu.memory_space<vmem>>, vector<2x128x64xbf16>
    %c0_6 = arith.constant 0 : index
    %c0_7 = arith.constant 0 : index
    %c0_8 = arith.constant 0 : index
    %5 = vector.load %arg4[%c0_6, %c0_7, %c0_8] : memref<2x128x32xbf16, #tpu.memory_space<vmem>>, vector<2x128x32xbf16>
    %cst = arith.constant dense<0.000000e+00> : vector<2x16x128xf32>
    %6 = tpu.matmul %3, %4, %cst {dimension_numbers = #tpu.dot_dimension_numbers<[2], [2], [1], [1], [0, 0, 0, 1, 1, 1], [0], [0]>} : vector<2x16x64xbf16>, vector<2x128x64xbf16>, vector<2x16x128xf32> -> vector<2x16x128xf32>
    %c0_9 = arith.constant 0 : index
    %c0_10 = arith.constant 0 : index
    %7 = vector.load %arg5[%c0_9, %c0_10] : memref<16x128xbf16, #tpu.memory_space<vmem>>, vector<16x128xbf16>
    %8 = vector.shape_cast %7 : vector<16x128xbf16> to vector<1x16x128xbf16>
    %9 = arith.extf %8 : vector<1x16x128xbf16> to vector<1x16x128xf32>
    %10 = vector.broadcast %9 : vector<1x16x128xf32> to vector<2x16x128xf32>
    %11 = arith.addf %6, %10 : vector<2x16x128xf32>
    %cst_11 = arith.constant dense<0xFF800000> : vector<2x128xf32>
    %12 = vector.multi_reduction <maximumf>, %11, %cst_11 [1] : vector<2x16x128xf32> to vector<2x128xf32>
    %13 = vector.shape_cast %12 : vector<2x128xf32> to vector<2x1x128xf32>
    %14 = vector.broadcast %13 : vector<2x1x128xf32> to vector<2x16x128xf32>
    %15 = arith.subf %11, %14 : vector<2x16x128xf32>
    %16 = math.exp %15 : vector<2x16x128xf32>
    %cst_12 = arith.constant dense<0.000000e+00> : vector<2x128xf32>
    %17 = vector.multi_reduction <add>, %16, %cst_12 [1] : vector<2x16x128xf32> to vector<2x128xf32>
    %18 = vector.shape_cast %17 : vector<2x128xf32> to vector<2x1x128xf32>
    %19 = tpu.reciprocal %18 {approx = true} : vector<2x1x128xf32> -> vector<2x1x128xf32>
    %20 = vector.broadcast %19 : vector<2x1x128xf32> to vector<2x16x128xf32>
    %21 = arith.mulf %16, %20 : vector<2x16x128xf32>
    %22 = arith.truncf %21 : vector<2x16x128xf32> to vector<2x16x128xbf16>
    %c0_13 = arith.constant 0 : index
    %c0_14 = arith.constant 0 : index
    %c0_15 = arith.constant 0 : index
    %23 = vector.load %arg6[%c0_13, %c0_14, %c0_15] : memref<2x16x32xf32, #tpu.memory_space<vmem>>, vector<2x16x32xf32>
    %cst_16 = arith.constant dense<0.000000e+00> : vector<2x16x32xf32>
    %24 = tpu.matmul %22, %5, %cst_16 {dimension_numbers = #tpu.dot_dimension_numbers<[2], [1], [1], [2], [0, 0, 0, 1, 1, 2], [0], [0]>} : vector<2x16x128xbf16>, vector<2x128x32xbf16>, vector<2x16x32xf32> -> vector<2x16x32xf32>
    %25 = arith.addf %23, %24 : vector<2x16x32xf32>
    %c0_17 = arith.constant 0 : index
    %c0_18 = arith.constant 0 : index
    %c0_19 = arith.constant 0 : index
    %26 = vector.load %arg6[%c0_17, %c0_18, %c0_19] : memref<2x16x32xf32, #tpu.memory_space<vmem>>, vector<2x16x32xf32>
    tpu.vector_store %arg6[%c0_17, %c0_18, %c0_19], %25 {strides = array<i32>} : memref<2x16x32xf32, #tpu.memory_space<vmem>>, vector<2x16x32xf32>,
    return
  }
  func.func @transform_0(%arg0: i32, %arg1: i32) -> (i32, i32, i32) {
    %c0_i32 = arith.constant 0 : i32
    %c0_i32_0 = arith.constant 0 : i32
    %c0_i32_1 = arith.constant 0 : i32
    return %arg0, %c0_i32, %c0_i32_0 : i32, i32, i32
  }
  func.func @transform_1(%arg0: i32, %arg1: i32) -> (i32, i32, i32) {
    %c0_i32 = arith.constant 0 : i32
    %c0_i32_0 = arith.constant 0 : i32
    return %arg0, %arg1, %c0_i32 : i32, i32, i32
  }
  func.func @transform_2(%arg0: i32, %arg1: i32) -> (i32, i32, i32) {
    %c0_i32 = arith.constant 0 : i32
    %c0_i32_0 = arith.constant 0 : i32
    return %arg0, %arg1, %c0_i32 : i32, i32, i32
  }
  func.func @transform_3(%arg0: i32, %arg1: i32) -> (i32, i32) {
    %c0_i32 = arith.constant 0 : i32
    %c0_i32_0 = arith.constant 0 : i32
    return %c0_i32, %arg1 : i32, i32
  }
  func.func @transform_4(%arg0: i32, %arg1: i32) -> (i32, i32, i32) {
    %c0_i32 = arith.constant 0 : i32
    %c0_i32_0 = arith.constant 0 : i32
    %c0_i32_1 = arith.constant 0 : i32
    return %arg0, %c0_i32, %c0_i32_0 : i32, i32, i32
  }
}

</mosaic_0001>

<llo_original>
// kernel: tpu_custom_call.1
$region0: #{tpu_custom_call.1}
  #allocation0 [shape = 'u32[]', space=smem, size = 0x4, offset = 0x4, fixed_abs, tag = 'smem constant byte address 0x4 - core index']
  #allocation1 [shape = 'u32[144,128]{1,0:T(1,128)}', space=vmem, size = 0x12000, scoped, tag = 'internal scratch']
  #allocation2 [shape = 'bf16[2,16,64]{2,1,0:T(8,128)(2,1)}', space=vmem, size = 0x2000, scoped, tag = 'scratch operand']
  %s0 = inlined_call_operand.vmem [shape: f32[4,16,64], index: 0, kind: input, shape index: {}]
  %s1 = inlined_call_operand.vmem [shape: bf16[4,256,64], index: 1, kind: input, shape index: {}]
  %s2 = inlined_call_operand.vmem [shape: bf16[4,256,32], index: 2, kind: input, shape index: {}]
  %s3 = inlined_call_operand.vmem [shape: bf16[16,256], index: 3, kind: input, shape index: {}]
  %s4 = inlined_call_operand.hbm [shape: f32[4,16,32], index: 4, kind: output, shape index: {}]
  %s5 = sld [smem:[#allocation0]]
  $region176: #{tpu_custom_call.1} parent=0
    _
  %s7 = ssub.s32 1, %s5
  %s8 = scalar_select 0, %s7, %s5
  $region1: #{tpu_custom_call.1} parent=0
    #allocation3 [shape = 'u8[131072]{0}', space=vmem, size = 0x20000, scoped, tag = 'input window, operand 1']
    #allocation4 [shape = 'u8[131072]{0}', space=vmem, size = 0x20000, scoped, tag = 'input window, operand 2']
    #allocation5 [shape = 'u8[8192]{0}', space=vmem, size = 0x2000, scoped, tag = 'input window, operand 3']
    #allocation6 [shape = 'u8[32768]{0}', space=vmem, size = 0x8000, scoped, tag = 'output window, operand 0']
    #allocation7 [shape = 's32[2]{0}', space=sflag, size = 0x8, scoped, tag = 'scoped memory for tpu_custom_call.1']
    %9 = vsyncpa [#allocation7], 0
    %s10 = scalar_lea.sflag [#allocation7], 1
    %11 = vsyncpa %s10, 0
    loop: start=0, step=1, limit=6
    $region2: #{tpu_custom_call.1} parent=1 // loop_pre_header
      _
    $region3: #{tpu_custom_call.1} parent=1 // loop_header
      %s13 = sphi 0, %s17
      %p14 = scmp.ge.s32.totalorder %s13, 6
      %s20 = sphi 0, %s32
      %s21 = sphi 0, %s28
      %s22 = sphi 0, %s20
      %s23 = sphi 0, %s21
      %s24 = sphi 0, %s22
      %s25 = sphi 0, %s23
      %s35 = sphi 0, %s37
      %s38 = sphi 0, %s35
      %s39 = sphi 0, %s38
      %s55 = sphi 0, %s39
      %s63 = sphi 0, %s65
      %s66 = sphi 0, %s63
      %s67 = sphi 0, %s66
      %s83 = sphi 0, %s67
      %s91 = sphi 0, %s93
      %s94 = sphi 0, %s91
      %s95 = sphi 0, %s94
      %s111 = sphi 0, %s95
      %s117 = sphi 0, %s119
      %s120 = sphi 0, %s117
      %s121 = sphi 0, %s120
      %s137 = sphi 0, %s121
      %s143 = sphi 0, %s145
      %s146 = sphi 0, %s143
      %s147 = sphi 0, %s146
      %s163 = sphi 0, %s147
    $region4: #{tpu_custom_call.1} parent=1 // loop_header_branch
      %16 = sbr.rel (%p14) target = $region8
    $region5: #{tpu_custom_call.1} parent=1 // loop_body
      %s18 = ssub.s32 %s13, 1
      %s19 = ssub.s32 %s13, 2
      %s26 = sadd.s32 1, %s21
      %p27 = scmp.ge.s32.totalorder %s26, 2
      %s28 = scalar_select %p27, 0, %s26
      %s29 = sadd.s32 1, %s20
      %s30 = scalar_select %p27, %s29, %s20
      %p31 = scmp.ge.s32.totalorder %s30, 2
      %s32 = scalar_select %p31, 0, %s30
      %s33 = ssub.s32 %s20, %s32
      %p34 = scmp.eq.s32.totalorder %s33, 0
      %s36 = sadd.s32 %s35, 1
      %s37 = scalar_select %p34, %s35, %s36
      %p40 = pneg %p34
      %p41 = scmp.eq.s32.totalorder %s13, 3
      %p42 = por %p40, %p41
      %p43 = scmp.ne.s32.totalorder %s35, %s38
      %p44 = scmp.eq.s32.totalorder %s13, 0
      %p45 = por %p43, %p44
      %p46 = scmp.ne.s32.totalorder %s35, %s38
      %p47 = scmp.eq.s32.totalorder %s18, 3
      %p48 = por %p46, %p47
      %p49 = scmp.ne.s32.totalorder %s38, %s39
      %p50 = scmp.eq.s32.totalorder %s18, 0
      %p51 = por %p49, %p50
      %p52 = scmp.ne.s32.totalorder %s38, %s39
      %p53 = scmp.eq.s32.totalorder %s19, 3
      %p54 = por %p52, %p53
      %p56 = scmp.ne.s32.totalorder %s39, %s55
      %p57 = scmp.eq.s32.totalorder %s19, 0
      %p58 = por %p56, %p57
      %s59 = ssub.s32 %s20, %s32
      %s60 = ssub.s32 %s21, %s28
      %s61 = sor.u32 %s59, %s60
      %p62 = scmp.eq.s32.totalorder %s61, 0
      %s64 = sadd.s32 %s63, 1
      %s65 = scalar_select %p62, %s63, %s64
      %p68 = pneg %p62
      %p69 = scmp.eq.s32.totalorder %s13, 3
      %p70 = por %p68, %p69
      %p71 = scmp.ne.s32.totalorder %s63, %s66
      %p72 = scmp.eq.s32.totalorder %s13, 0
      %p73 = por %p71, %p72
      %p74 = scmp.ne.s32.totalorder %s63, %s66
      %p75 = scmp.eq.s32.totalorder %s18, 3
      %p76 = por %p74, %p75
      %p77 = scmp.ne.s32.totalorder %s66, %s67
      %p78 = scmp.eq.s32.totalorder %s18, 0
      %p79 = por %p77, %p78
      %p80 = scmp.ne.s32.totalorder %s66, %s67
      %p81 = scmp.eq.s32.totalorder %s19, 3
      %p82 = por %p80, %p81
      %p84 = scmp.ne.s32.totalorder %s67, %s83
      %p85 = scmp.eq.s32.totalorder %s19, 0
      %p86 = por %p84, %p85
      %s87 = ssub.s32 %s20, %s32
      %s88 = ssub.s32 %s21, %s28
      %s89 = sor.u32 %s87, %s88
      %p90 = scmp.eq.s32.totalorder %s89, 0
      %s92 = sadd.s32 %s91, 1
      %s93 = scalar_select %p90, %s91, %s92
      %p96 = pneg %p90
      %p97 = scmp.eq.s32.totalorder %s13, 3
      %p98 = por %p96, %p97
      %p99 = scmp.ne.s32.totalorder %s91, %s94
      %p100 = scmp.eq.s32.totalorder %s13, 0
      %p101 = por %p99, %p100
      %p102 = scmp.ne.s32.totalorder %s91, %s94
      %p103 = scmp.eq.s32.totalorder %s18, 3
      %p104 = por %p102, %p103
      %p105 = scmp.ne.s32.totalorder %s94, %s95
      %p106 = scmp.eq.s32.totalorder %s18, 0
      %p107 = por %p105, %p106
      %p108 = scmp.ne.s32.totalorder %s94, %s95
      %p109 = scmp.eq.s32.totalorder %s19, 3
      %p110 = por %p108, %p109
      %p112 = scmp.ne.s32.totalorder %s95, %s111
      %p113 = scmp.eq.s32.totalorder %s19, 0
      %p114 = por %p112, %p113
      %s115 = ssub.s32 %s21, %s28
      %p116 = scmp.eq.s32.totalorder %s115, 0
      %s118 = sadd.s32 %s117, 1
      %s119 = scalar_select %p116, %s117, %s118
      %p122 = pneg %p116
      %p123 = scmp.eq.s32.totalorder %s13, 3
      %p124 = por %p122, %p123
      %p125 = scmp.ne.s32.totalorder %s117, %s120
      %p126 = scmp.eq.s32.totalorder %s13, 0
      %p127 = por %p125, %p126
      %p128 = scmp.ne.s32.totalorder %s117, %s120
      %p129 = scmp.eq.s32.totalorder %s18, 3
      %p130 = por %p128, %p129
      %p131 = scmp.ne.s32.totalorder %s120, %s121
      %p132 = scmp.eq.s32.totalorder %s18, 0
      %p133 = por %p131, %p132
      %p134 = scmp.ne.s32.totalorder %s120, %s121
      %p135 = scmp.eq.s32.totalorder %s19, 3
      %p136 = por %p134, %p135
      %p138 = scmp.ne.s32.totalorder %s121, %s137
      %p139 = scmp.eq.s32.totalorder %s19, 0
      %p140 = por %p138, %p139
      %s141 = ssub.s32 %s20, %s32
      %p142 = scmp.eq.s32.totalorder %s141, 0
      %s144 = sadd.s32 %s143, 1
      %s145 = scalar_select %p142, %s143, %s144
      %p148 = pneg %p142
      %p149 = scmp.eq.s32.totalorder %s13, 3
      %p150 = por %p148, %p149
      %p151 = scmp.ne.s32.totalorder %s143, %s146
      %p152 = scmp.eq.s32.totalorder %s13, 0
      %p153 = por %p151, %p152
      %p154 = scmp.ne.s32.totalorder %s143, %s146
      %p155 = scmp.eq.s32.totalorder %s18, 3
      %p156 = por %p154, %p155
      %p157 = scmp.ne.s32.totalorder %s146, %s147
      %p158 = scmp.eq.s32.totalorder %s18, 0
      %p159 = por %p157, %p158
      %p160 = scmp.ne.s32.totalorder %s146, %s147
      %p161 = scmp.eq.s32.totalorder %s19, 3
      %p162 = por %p160, %p161
      %p164 = scmp.ne.s32.totalorder %s147, %s163
      %p165 = scmp.eq.s32.totalorder %s19, 0
      %p166 = por %p164, %p165
      %p167 = scmp.le.s32.totalorder 1, %s13
      %p168 = scmp.lt.s32.totalorder %s13, 5
      %p169 = pnand %p167, %p168
      %p170 = pneg %p169
      // Predicated region
      $region9: #{tpu_custom_call.1} parent=5 // pred_check
        _
      $region10: #{tpu_custom_call.1} parent=5 // pred_check_branch
        %172 = sbr.rel (%p169) target = $region12
      $region11: #{tpu_custom_call.1} parent=5 // pred_region
        %s173 = ssub.s32 %s13, 1
      $region12: #{tpu_custom_call.1} parent=5 // pred_fallthru
        _
      %p174 = scmp.lt.s32.totalorder %s13, 4
      // Predicated region
      $region13: #{tpu_custom_call.1} parent=5 // pred_check
        %p175 = pneg %p174
      $region14: #{tpu_custom_call.1} parent=5 // pred_check_branch
        %177 = sbr.rel (%p175) target = $region16
      $region15: #{tpu_custom_call.1} parent=5 // pred_region
        // Predicated region
        $region17: #{tpu_custom_call.1} parent=15 // pred_check
          %p178 = pneg %p45
        $region18: #{tpu_custom_call.1} parent=15 // pred_check_branch
          %180 = sbr.rel (%p178) target = $region20
        $region19: #{tpu_custom_call.1} parent=15 // pred_region
          %s181 = smul.u32 2, %s20
          %p182 = scmp.lt.s32.totalorder %s181, 3
          %s183 = scalar_select %p182, %s181, 3
          %s184 = smul.addr %s183, 2
          %s185 = smul.addr %s184, 8
          %s186 = scalar_lea.vmem %s0, %s185
          %s187 = smul.u32 2, %s20
        $region20: #{tpu_custom_call.1} parent=15 // pred_fallthru
          _
        // Predicated region
        $region21: #{tpu_custom_call.1} parent=15 // pred_check
          %p188 = pneg %p73
        $region22: #{tpu_custom_call.1} parent=15 // pred_check_branch
          %190 = sbr.rel (%p188) target = $region24
        $region23: #{tpu_custom_call.1} parent=15 // pred_region
          %s191 = sand.u32 %s63, 1
          %s192 = sand.u32 %s63, 1
          %s193 = smul.addr %s192, 128
          %s194 = scalar_lea.vmem [#allocation3], %s193
          %s195 = smul.u32 2, %s20
          %s196 = smul.u32 16, %s21
          %s197 = smul.addr %s195, 32
          %s198 = sadd.s32 %s196, %s197
          %s199 = smul.addr %s198, 4
          %s200 = scalar_lea.vmem %s1, %s199
          // Predicated region
          $region25: #{tpu_custom_call.1} parent=23 // pred_check
            _
          $region26: #{tpu_custom_call.1} parent=23 // pred_check_branch
            %202 = sbr.rel (0) target = $region28
          $region27: #{tpu_custom_call.1} parent=23 // pred_region
            // Predicated region
            $region29: #{tpu_custom_call.1} parent=27 // pred_check
              _
            $region30: #{tpu_custom_call.1} parent=27 // pred_check_branch
              %204 = sbr.rel target = $region32
            $region31: #{tpu_custom_call.1} parent=27 // pred_region
              // Predicated region
              $region44: #{tpu_custom_call.1} parent=31 // pred_check
                _
              $region45: #{tpu_custom_call.1} parent=31 // pred_check_branch
                %282 = sbr.rel (0) target = $region47
              $region46: #{tpu_custom_call.1} parent=31 // pred_region
                loop: start=0, step=1, limit=1
                $region48: #{tpu_custom_call.1} parent=46 // loop_pre_header
                  _
                $region49: #{tpu_custom_call.1} parent=46 // loop_header
                  %s284 = sphi 0, %s288
                  %p285 = scmp.ge.s32.totalorder %s284, 1
                  %s289 = sphi %s200, %s200
                  %s290 = sphi %s194, %s194
                $region50: #{tpu_custom_call.1} parent=46 // loop_header_branch
                  %287 = sbr.rel (%p285) target = $region54
                $region51: #{tpu_custom_call.1} parent=46 // loop_body
                  _
                $region52: #{tpu_custom_call.1} parent=46 // loop_footer
                  %s288 = sadd.s32 1, %s284
                $region53: #{tpu_custom_call.1} parent=46 // loop_footer_branch
                  %283 = sbr.rel target = $region49
                $region54: #{tpu_custom_call.1} parent=46 // loop_exit
                  _
                %s292 = ssub.s32 16, 1
                loop: start=0, step=1, limit=1
                $region55: #{tpu_custom_call.1} parent=46 // loop_pre_header
                  _
                $region56: #{tpu_custom_call.1} parent=46 // loop_header
                  %s294 = sphi 0, %s298
                  %p295 = scmp.ge.s32.totalorder %s294, 1
                  %s299 = sphi %s200, %s200
                  %s300 = sphi %s194, %s194
                $region57: #{tpu_custom_call.1} parent=46 // loop_header_branch
                  %297 = sbr.rel (%p295) target = $region61
                $region58: #{tpu_custom_call.1} parent=46 // loop_body
                  %v301 = vld [vmem:[%s299] sm:%s292]
                  %302 = vst [vmem:[%s300] sm:%s292] %v301
                  %v303 = vld [vmem:[%s299 + $0x4] sm:%s292]
                  %304 = vst [vmem:[%s300 + $0x4] sm:%s292] %v303
                  %v305 = vld [vmem:[%s299 + $0x8] sm:%s292]
                  %306 = vst [vmem:[%s300 + $0x8] sm:%s292] %v305
                  %v307 = vld [vmem:[%s299 + $0xc] sm:%s292]
                  %308 = vst [vmem:[%s300 + $0xc] sm:%s292] %v307
                  %v309 = vld [vmem:[%s299 + $0x10] sm:%s292]
                  %310 = vst [vmem:[%s300 + $0x10] sm:%s292] %v309
                  %v311 = vld [vmem:[%s299 + $0x14] sm:%s292]
                  %312 = vst [vmem:[%s300 + $0x14] sm:%s292] %v311
                  %v313 = vld [vmem:[%s299 + $0x18] sm:%s292]
                  %314 = vst [vmem:[%s300 + $0x18] sm:%s292] %v313
                  %v315 = vld [vmem:[%s299 + $0x1c] sm:%s292]
                  %316 = vst [vmem:[%s300 + $0x1c] sm:%s292] %v315
                  %v317 = vld [vmem:[%s299 + $0x20] sm:%s292]
                  %318 = vst [vmem:[%s300 + $0x20] sm:%s292] %v317
                  %v319 = vld [vmem:[%s299 + $0x24] sm:%s292]
                  %320 = vst [vmem:[%s300 + $0x24] sm:%s292] %v319
                  %v321 = vld [vmem:[%s299 + $0x28] sm:%s292]
                  %322 = vst [vmem:[%s300 + $0x28] sm:%s292] %v321
                  %v323 = vld [vmem:[%s299 + $0x2c] sm:%s292]
                  %324 = vst [vmem:[%s300 + $0x2c] sm:%s292] %v323
                  %v325 = vld [vmem:[%s299 + $0x30] sm:%s292]
                  %326 = vst [vmem:[%s300 + $0x30] sm:%s292] %v325
                  %v327 = vld [vmem:[%s299 + $0x34] sm:%s292]
                  %328 = vst [vmem:[%s300 + $0x34] sm:%s292] %v327
                  %v329 = vld [vmem:[%s299 + $0x38] sm:%s292]
                  %330 = vst [vmem:[%s300 + $0x38] sm:%s292] %v329
                  %v331 = vld [vmem:[%s299 + $0x3c] sm:%s292]
                  %332 = vst [vmem:[%s300 + $0x3c] sm:%s292] %v331
                  %v333 = vld [vmem:[%s299 + $0x80] sm:%s292]
                  %334 = vst [vmem:[%s300 + $0x40] sm:%s292] %v333
                  %v335 = vld [vmem:[%s299 + $0x84] sm:%s292]
                  %336 = vst [vmem:[%s300 + $0x44] sm:%s292] %v335
                  %v337 = vld [vmem:[%s299 + $0x88] sm:%s292]
                  %338 = vst [vmem:[%s300 + $0x48] sm:%s292] %v337
                  %v339 = vld [vmem:[%s299 + $0x8c] sm:%s292]
                  %340 = vst [vmem:[%s300 + $0x4c] sm:%s292] %v339
                  %v341 = vld [vmem:[%s299 + $0x90] sm:%s292]
                  %342 = vst [vmem:[%s300 + $0x50] sm:%s292] %v341
                  %v343 = vld [vmem:[%s299 + $0x94] sm:%s292]
                  %344 = vst [vmem:[%s300 + $0x54] sm:%s292] %v343
                  %v345 = vld [vmem:[%s299 + $0x98] sm:%s292]
                  %346 = vst [vmem:[%s300 + $0x58] sm:%s292] %v345
                  %v347 = vld [vmem:[%s299 + $0x9c] sm:%s292]
                  %348 = vst [vmem:[%s300 + $0x5c] sm:%s292] %v347
                  %v349 = vld [vmem:[%s299 + $0xa0] sm:%s292]
                  %350 = vst [vmem:[%s300 + $0x60] sm:%s292] %v349
                  %v351 = vld [vmem:[%s299 + $0xa4] sm:%s292]
                  %352 = vst [vmem:[%s300 + $0x64] sm:%s292] %v351
                  %v353 = vld [vmem:[%s299 + $0xa8] sm:%s292]
                  %354 = vst [vmem:[%s300 + $0x68] sm:%s292] %v353
                  %v355 = vld [vmem:[%s299 + $0xac] sm:%s292]
                  %356 = vst [vmem:[%s300 + $0x6c] sm:%s292] %v355
                  %v357 = vld [vmem:[%s299 + $0xb0] sm:%s292]
                  %358 = vst [vmem:[%s300 + $0x70] sm:%s292] %v357
                  %v359 = vld [vmem:[%s299 + $0xb4] sm:%s292]
                  %360 = vst [vmem:[%s300 + $0x74] sm:%s292] %v359
                  %v361 = vld [vmem:[%s299 + $0xb8] sm:%s292]
                  %362 = vst [vmem:[%s300 + $0x78] sm:%s292] %v361
                  %v363 = vld [vmem:[%s299 + $0xbc] sm:%s292]
                  %364 = vst [vmem:[%s300 + $0x7c] sm:%s292] %v363
                $region59: #{tpu_custom_call.1} parent=46 // loop_footer
                  %s298 = sadd.s32 1, %s294
                $region60: #{tpu_custom_call.1} parent=46 // loop_footer_branch
                  %293 = sbr.rel target = $region56
                $region61: #{tpu_custom_call.1} parent=46 // loop_exit
                  _
              $region47: #{tpu_custom_call.1} parent=31 // pred_fallthru
                _
            $region32: #{tpu_custom_call.1} parent=27 // pred_fallthru
              _
            // Predicated region
            $region33: #{tpu_custom_call.1} parent=27 // pred_check
              _
            $region34: #{tpu_custom_call.1} parent=27 // pred_check_branch
              %206 = sbr.rel (0) target = $region36
            $region35: #{tpu_custom_call.1} parent=27 // pred_region
              %s208 = ssub.s32 16, 1
              loop: start=0, step=1, limit=1
              $region37: #{tpu_custom_call.1} parent=35 // loop_pre_header
                _
              $region38: #{tpu_custom_call.1} parent=35 // loop_header
                %s210 = sphi 0, %s214
                %p211 = scmp.ge.s32.totalorder %s210, 1
                %s215 = sphi %s200, %s200
                %s216 = sphi %s194, %s194
              $region39: #{tpu_custom_call.1} parent=35 // loop_header_branch
                %213 = sbr.rel (%p211) target = $region43
              $region40: #{tpu_custom_call.1} parent=35 // loop_body
                %v217 = vld [vmem:[%s215] sm:%s208]
                %218 = vst [vmem:[%s216] sm:%s208] %v217
                %v219 = vld [vmem:[%s215 + $0x4] sm:%s208]
                %220 = vst [vmem:[%s216 + $0x4] sm:%s208] %v219
                %v221 = vld [vmem:[%s215 + $0x8] sm:%s208]
                %222 = vst [vmem:[%s216 + $0x8] sm:%s208] %v221
                %v223 = vld [vmem:[%s215 + $0xc] sm:%s208]
                %224 = vst [vmem:[%s216 + $0xc] sm:%s208] %v223
                %v225 = vld [vmem:[%s215 + $0x10] sm:%s208]
                %226 = vst [vmem:[%s216 + $0x10] sm:%s208] %v225
                %v227 = vld [vmem:[%s215 + $0x14] sm:%s208]
                %228 = vst [vmem:[%s216 + $0x14] sm:%s208] %v227
                %v229 = vld [vmem:[%s215 + $0x18] sm:%s208]
                %230 = vst [vmem:[%s216 + $0x18] sm:%s208] %v229
                %v231 = vld [vmem:[%s215 + $0x1c] sm:%s208]
                %232 = vst [vmem:[%s216 + $0x1c] sm:%s208] %v231
                %v233 = vld [vmem:[%s215 + $0x20] sm:%s208]
                %234 = vst [vmem:[%s216 + $0x20] sm:%s208] %v233
                %v235 = vld [vmem:[%s215 + $0x24] sm:%s208]
                %236 = vst [vmem:[%s216 + $0x24] sm:%s208] %v235
                %v237 = vld [vmem:[%s215 + $0x28] sm:%s208]
                %238 = vst [vmem:[%s216 + $0x28] sm:%s208] %v237
                %v239 = vld [vmem:[%s215 + $0x2c] sm:%s208]
                %240 = vst [vmem:[%s216 + $0x2c] sm:%s208] %v239
                %v241 = vld [vmem:[%s215 + $0x30] sm:%s208]
                %242 = vst [vmem:[%s216 + $0x30] sm:%s208] %v241
                %v243 = vld [vmem:[%s215 + $0x34] sm:%s208]
                %244 = vst [vmem:[%s216 + $0x34] sm:%s208] %v243
                %v245 = vld [vmem:[%s215 + $0x38] sm:%s208]
                %246 = vst [vmem:[%s216 + $0x38] sm:%s208] %v245
                %v247 = vld [vmem:[%s215 + $0x3c] sm:%s208]
                %248 = vst [vmem:[%s216 + $0x3c] sm:%s208] %v247
                %v249 = vld [vmem:[%s215 + $0x80] sm:%s208]
                %250 = vst [vmem:[%s216 + $0x40] sm:%s208] %v249
                %v251 = vld [vmem:[%s215 + $0x84] sm:%s208]
                %252 = vst [vmem:[%s216 + $0x44] sm:%s208] %v251
                %v253 = vld [vmem:[%s215 + $0x88] sm:%s208]
                %254 = vst [vmem:[%s216 + $0x48] sm:%s208] %v253
                %v255 = vld [vmem:[%s215 + $0x8c] sm:%s208]
                %256 = vst [vmem:[%s216 + $0x4c] sm:%s208] %v255
                %v257 = vld [vmem:[%s215 + $0x90] sm:%s208]
                %258 = vst [vmem:[%s216 + $0x50] sm:%s208] %v257
                %v259 = vld [vmem:[%s215 + $0x94] sm:%s208]
                %260 = vst [vmem:[%s216 + $0x54] sm:%s208] %v259
                %v261 = vld [vmem:[%s215 + $0x98] sm:%s208]
                %262 = vst [vmem:[%s216 + $0x58] sm:%s208] %v261
                %v263 = vld [vmem:[%s215 + $0x9c] sm:%s208]
                %264 = vst [vmem:[%s216 + $0x5c] sm:%s208] %v263
                %v265 = vld [vmem:[%s215 + $0xa0] sm:%s208]
                %266 = vst [vmem:[%s216 + $0x60] sm:%s208] %v265
                %v267 = vld [vmem:[%s215 + $0xa4] sm:%s208]
                %268 = vst [vmem:[%s216 + $0x64] sm:%s208] %v267
                %v269 = vld [vmem:[%s215 + $0xa8] sm:%s208]
                %270 = vst [vmem:[%s216 + $0x68] sm:%s208] %v269
                %v271 = vld [vmem:[%s215 + $0xac] sm:%s208]
                %272 = vst [vmem:[%s216 + $0x6c] sm:%s208] %v271
                %v273 = vld [vmem:[%s215 + $0xb0] sm:%s208]
                %274 = vst [vmem:[%s216 + $0x70] sm:%s208] %v273
                %v275 = vld [vmem:[%s215 + $0xb4] sm:%s208]
                %276 = vst [vmem:[%s216 + $0x74] sm:%s208] %v275
                %v277 = vld [vmem:[%s215 + $0xb8] sm:%s208]
                %278 = vst [vmem:[%s216 + $0x78] sm:%s208] %v277
                %v279 = vld [vmem:[%s215 + $0xbc] sm:%s208]
                %280 = vst [vmem:[%s216 + $0x7c] sm:%s208] %v279
              $region41: #{tpu_custom_call.1} parent=35 // loop_footer
                %s214 = sadd.s32 1, %s210
              $region42: #{tpu_custom_call.1} parent=35 // loop_footer_branch
                %209 = sbr.rel target = $region38
              $region43: #{tpu_custom_call.1} parent=35 // loop_exit
                _
            $region36: #{tpu_custom_call.1} parent=27 // pred_fallthru
              _
          $region28: #{tpu_custom_call.1} parent=23 // pred_fallthru
            _
          %365 = vnop
        $region24: #{tpu_custom_call.1} parent=15 // pred_fallthru
          _
        // Predicated region
        $region62: #{tpu_custom_call.1} parent=15 // pred_check
          %p366 = pneg %p101
        $region63: #{tpu_custom_call.1} parent=15 // pred_check_branch
          %368 = sbr.rel (%p366) target = $region65
        $region64: #{tpu_custom_call.1} parent=15 // pred_region
          %s369 = sand.u32 %s91, 1
          %s370 = sand.u32 %s91, 1
          %s371 = smul.addr %s370, 128
          %s372 = scalar_lea.vmem [#allocation4], %s371
          %s373 = smul.u32 2, %s20
          %s374 = smul.u32 16, %s21
          %s375 = smul.addr %s373, 32
          %s376 = sadd.s32 %s374, %s375
          %s377 = smul.addr %s376, 4
          %s378 = scalar_lea.vmem %s2, %s377
          // Predicated region
          $region66: #{tpu_custom_call.1} parent=64 // pred_check
            _
          $region67: #{tpu_custom_call.1} parent=64 // pred_check_branch
            %380 = sbr.rel (0) target = $region69
          $region68: #{tpu_custom_call.1} parent=64 // pred_region
            // Predicated region
            $region70: #{tpu_custom_call.1} parent=68 // pred_check
              _
            $region71: #{tpu_custom_call.1} parent=68 // pred_check_branch
              %382 = sbr.rel target = $region73
            $region72: #{tpu_custom_call.1} parent=68 // pred_region
              // Predicated region
              $region85: #{tpu_custom_call.1} parent=72 // pred_check
                _
              $region86: #{tpu_custom_call.1} parent=72 // pred_check_branch
                %460 = sbr.rel (0) target = $region88
              $region87: #{tpu_custom_call.1} parent=72 // pred_region
                loop: start=0, step=1, limit=1
                $region89: #{tpu_custom_call.1} parent=87 // loop_pre_header
                  _
                $region90: #{tpu_custom_call.1} parent=87 // loop_header
                  %s462 = sphi 0, %s466
                  %p463 = scmp.ge.s32.totalorder %s462, 1
                  %s467 = sphi %s378, %s378
                  %s468 = sphi %s372, %s372
                $region91: #{tpu_custom_call.1} parent=87 // loop_header_branch
                  %465 = sbr.rel (%p463) target = $region95
                $region92: #{tpu_custom_call.1} parent=87 // loop_body
                  _
                $region93: #{tpu_custom_call.1} parent=87 // loop_footer
                  %s466 = sadd.s32 1, %s462
                $region94: #{tpu_custom_call.1} parent=87 // loop_footer_branch
                  %461 = sbr.rel target = $region90
                $region95: #{tpu_custom_call.1} parent=87 // loop_exit
                  _
                %s470 = ssub.s32 16, 1
                loop: start=0, step=1, limit=1
                $region96: #{tpu_custom_call.1} parent=87 // loop_pre_header
                  _
                $region97: #{tpu_custom_call.1} parent=87 // loop_header
                  %s472 = sphi 0, %s476
                  %p473 = scmp.ge.s32.totalorder %s472, 1
                  %s477 = sphi %s378, %s378
                  %s478 = sphi %s372, %s372
                $region98: #{tpu_custom_call.1} parent=87 // loop_header_branch
                  %475 = sbr.rel (%p473) target = $region102
                $region99: #{tpu_custom_call.1} parent=87 // loop_body
                  %v479 = vld [vmem:[%s477] sm:%s470]
                  %480 = vst [vmem:[%s478] sm:%s470] %v479
                  %v481 = vld [vmem:[%s477 + $0x4] sm:%s470]
                  %482 = vst [vmem:[%s478 + $0x4] sm:%s470] %v481
                  %v483 = vld [vmem:[%s477 + $0x8] sm:%s470]
                  %484 = vst [vmem:[%s478 + $0x8] sm:%s470] %v483
                  %v485 = vld [vmem:[%s477 + $0xc] sm:%s470]
                  %486 = vst [vmem:[%s478 + $0xc] sm:%s470] %v485
                  %v487 = vld [vmem:[%s477 + $0x10] sm:%s470]
                  %488 = vst [vmem:[%s478 + $0x10] sm:%s470] %v487
                  %v489 = vld [vmem:[%s477 + $0x14] sm:%s470]
                  %490 = vst [vmem:[%s478 + $0x14] sm:%s470] %v489
                  %v491 = vld [vmem:[%s477 + $0x18] sm:%s470]
                  %492 = vst [vmem:[%s478 + $0x18] sm:%s470] %v491
                  %v493 = vld [vmem:[%s477 + $0x1c] sm:%s470]
                  %494 = vst [vmem:[%s478 + $0x1c] sm:%s470] %v493
                  %v495 = vld [vmem:[%s477 + $0x20] sm:%s470]
                  %496 = vst [vmem:[%s478 + $0x20] sm:%s470] %v495
                  %v497 = vld [vmem:[%s477 + $0x24] sm:%s470]
                  %498 = vst [vmem:[%s478 + $0x24] sm:%s470] %v497
                  %v499 = vld [vmem:[%s477 + $0x28] sm:%s470]
                  %500 = vst [vmem:[%s478 + $0x28] sm:%s470] %v499
                  %v501 = vld [vmem:[%s477 + $0x2c] sm:%s470]
                  %502 = vst [vmem:[%s478 + $0x2c] sm:%s470] %v501
                  %v503 = vld [vmem:[%s477 + $0x30] sm:%s470]
                  %504 = vst [vmem:[%s478 + $0x30] sm:%s470] %v503
                  %v505 = vld [vmem:[%s477 + $0x34] sm:%s470]
                  %506 = vst [vmem:[%s478 + $0x34] sm:%s470] %v505
                  %v507 = vld [vmem:[%s477 + $0x38] sm:%s470]
                  %508 = vst [vmem:[%s478 + $0x38] sm:%s470] %v507
                  %v509 = vld [vmem:[%s477 + $0x3c] sm:%s470]
                  %510 = vst [vmem:[%s478 + $0x3c] sm:%s470] %v509
                  %v511 = vld [vmem:[%s477 + $0x80] sm:%s470]
                  %512 = vst [vmem:[%s478 + $0x40] sm:%s470] %v511
                  %v513 = vld [vmem:[%s477 + $0x84] sm:%s470]
                  %514 = vst [vmem:[%s478 + $0x44] sm:%s470] %v513
                  %v515 = vld [vmem:[%s477 + $0x88] sm:%s470]
                  %516 = vst [vmem:[%s478 + $0x48] sm:%s470] %v515
                  %v517 = vld [vmem:[%s477 + $0x8c] sm:%s470]
                  %518 = vst [vmem:[%s478 + $0x4c] sm:%s470] %v517
                  %v519 = vld [vmem:[%s477 + $0x90] sm:%s470]
                  %520 = vst [vmem:[%s478 + $0x50] sm:%s470] %v519
                  %v521 = vld [vmem:[%s477 + $0x94] sm:%s470]
                  %522 = vst [vmem:[%s478 + $0x54] sm:%s470] %v521
                  %v523 = vld [vmem:[%s477 + $0x98] sm:%s470]
                  %524 = vst [vmem:[%s478 + $0x58] sm:%s470] %v523
                  %v525 = vld [vmem:[%s477 + $0x9c] sm:%s470]
                  %526 = vst [vmem:[%s478 + $0x5c] sm:%s470] %v525
                  %v527 = vld [vmem:[%s477 + $0xa0] sm:%s470]
                  %528 = vst [vmem:[%s478 + $0x60] sm:%s470] %v527
                  %v529 = vld [vmem:[%s477 + $0xa4] sm:%s470]
                  %530 = vst [vmem:[%s478 + $0x64] sm:%s470] %v529
                  %v531 = vld [vmem:[%s477 + $0xa8] sm:%s470]
                  %532 = vst [vmem:[%s478 + $0x68] sm:%s470] %v531
                  %v533 = vld [vmem:[%s477 + $0xac] sm:%s470]
                  %534 = vst [vmem:[%s478 + $0x6c] sm:%s470] %v533
                  %v535 = vld [vmem:[%s477 + $0xb0] sm:%s470]
                  %536 = vst [vmem:[%s478 + $0x70] sm:%s470] %v535
                  %v537 = vld [vmem:[%s477 + $0xb4] sm:%s470]
                  %538 = vst [vmem:[%s478 + $0x74] sm:%s470] %v537
                  %v539 = vld [vmem:[%s477 + $0xb8] sm:%s470]
                  %540 = vst [vmem:[%s478 + $0x78] sm:%s470] %v539
                  %v541 = vld [vmem:[%s477 + $0xbc] sm:%s470]
                  %542 = vst [vmem:[%s478 + $0x7c] sm:%s470] %v541
                $region100: #{tpu_custom_call.1} parent=87 // loop_footer
                  %s476 = sadd.s32 1, %s472
                $region101: #{tpu_custom_call.1} parent=87 // loop_footer_branch
                  %471 = sbr.rel target = $region97
                $region102: #{tpu_custom_call.1} parent=87 // loop_exit
                  _
              $region88: #{tpu_custom_call.1} parent=72 // pred_fallthru
                _
            $region73: #{tpu_custom_call.1} parent=68 // pred_fallthru
              _
            // Predicated region
            $region74: #{tpu_custom_call.1} parent=68 // pred_check
              _
            $region75: #{tpu_custom_call.1} parent=68 // pred_check_branch
              %384 = sbr.rel (0) target = $region77
            $region76: #{tpu_custom_call.1} parent=68 // pred_region
              %s386 = ssub.s32 16, 1
              loop: start=0, step=1, limit=1
              $region78: #{tpu_custom_call.1} parent=76 // loop_pre_header
                _
              $region79: #{tpu_custom_call.1} parent=76 // loop_header
                %s388 = sphi 0, %s392
                %p389 = scmp.ge.s32.totalorder %s388, 1
                %s393 = sphi %s378, %s378
                %s394 = sphi %s372, %s372
              $region80: #{tpu_custom_call.1} parent=76 // loop_header_branch
                %391 = sbr.rel (%p389) target = $region84
              $region81: #{tpu_custom_call.1} parent=76 // loop_body
                %v395 = vld [vmem:[%s393] sm:%s386]
                %396 = vst [vmem:[%s394] sm:%s386] %v395
                %v397 = vld [vmem:[%s393 + $0x4] sm:%s386]
                %398 = vst [vmem:[%s394 + $0x4] sm:%s386] %v397
                %v399 = vld [vmem:[%s393 + $0x8] sm:%s386]
                %400 = vst [vmem:[%s394 + $0x8] sm:%s386] %v399
                %v401 = vld [vmem:[%s393 + $0xc] sm:%s386]
                %402 = vst [vmem:[%s394 + $0xc] sm:%s386] %v401
                %v403 = vld [vmem:[%s393 + $0x10] sm:%s386]
                %404 = vst [vmem:[%s394 + $0x10] sm:%s386] %v403
                %v405 = vld [vmem:[%s393 + $0x14] sm:%s386]
                %406 = vst [vmem:[%s394 + $0x14] sm:%s386] %v405
                %v407 = vld [vmem:[%s393 + $0x18] sm:%s386]
                %408 = vst [vmem:[%s394 + $0x18] sm:%s386] %v407
                %v409 = vld [vmem:[%s393 + $0x1c] sm:%s386]
                %410 = vst [vmem:[%s394 + $0x1c] sm:%s386] %v409
                %v411 = vld [vmem:[%s393 + $0x20] sm:%s386]
                %412 = vst [vmem:[%s394 + $0x20] sm:%s386] %v411
                %v413 = vld [vmem:[%s393 + $0x24] sm:%s386]
                %414 = vst [vmem:[%s394 + $0x24] sm:%s386] %v413
                %v415 = vld [vmem:[%s393 + $0x28] sm:%s386]
                %416 = vst [vmem:[%s394 + $0x28] sm:%s386] %v415
                %v417 = vld [vmem:[%s393 + $0x2c] sm:%s386]
                %418 = vst [vmem:[%s394 + $0x2c] sm:%s386] %v417
                %v419 = vld [vmem:[%s393 + $0x30] sm:%s386]
                %420 = vst [vmem:[%s394 + $0x30] sm:%s386] %v419
                %v421 = vld [vmem:[%s393 + $0x34] sm:%s386]
                %422 = vst [vmem:[%s394 + $0x34] sm:%s386] %v421
                %v423 = vld [vmem:[%s393 + $0x38] sm:%s386]
                %424 = vst [vmem:[%s394 + $0x38] sm:%s386] %v423
                %v425 = vld [vmem:[%s393 + $0x3c] sm:%s386]
                %426 = vst [vmem:[%s394 + $0x3c] sm:%s386] %v425
                %v427 = vld [vmem:[%s393 + $0x80] sm:%s386]
                %428 = vst [vmem:[%s394 + $0x40] sm:%s386] %v427
                %v429 = vld [vmem:[%s393 + $0x84] sm:%s386]
                %430 = vst [vmem:[%s394 + $0x44] sm:%s386] %v429
                %v431 = vld [vmem:[%s393 + $0x88] sm:%s386]
                %432 = vst [vmem:[%s394 + $0x48] sm:%s386] %v431
                %v433 = vld [vmem:[%s393 + $0x8c] sm:%s386]
                %434 = vst [vmem:[%s394 + $0x4c] sm:%s386] %v433
                %v435 = vld [vmem:[%s393 + $0x90] sm:%s386]
                %436 = vst [vmem:[%s394 + $0x50] sm:%s386] %v435
                %v437 = vld [vmem:[%s393 + $0x94] sm:%s386]
                %438 = vst [vmem:[%s394 + $0x54] sm:%s386] %v437
                %v439 = vld [vmem:[%s393 + $0x98] sm:%s386]
                %440 = vst [vmem:[%s394 + $0x58] sm:%s386] %v439
                %v441 = vld [vmem:[%s393 + $0x9c] sm:%s386]
                %442 = vst [vmem:[%s394 + $0x5c] sm:%s386] %v441
                %v443 = vld [vmem:[%s393 + $0xa0] sm:%s386]
                %444 = vst [vmem:[%s394 + $0x60] sm:%s386] %v443
                %v445 = vld [vmem:[%s393 + $0xa4] sm:%s386]
                %446 = vst [vmem:[%s394 + $0x64] sm:%s386] %v445
                %v447 = vld [vmem:[%s393 + $0xa8] sm:%s386]
                %448 = vst [vmem:[%s394 + $0x68] sm:%s386] %v447
                %v449 = vld [vmem:[%s393 + $0xac] sm:%s386]
                %450 = vst [vmem:[%s394 + $0x6c] sm:%s386] %v449
                %v451 = vld [vmem:[%s393 + $0xb0] sm:%s386]
                %452 = vst [vmem:[%s394 + $0x70] sm:%s386] %v451
                %v453 = vld [vmem:[%s393 + $0xb4] sm:%s386]
                %454 = vst [vmem:[%s394 + $0x74] sm:%s386] %v453
                %v455 = vld [vmem:[%s393 + $0xb8] sm:%s386]
                %456 = vst [vmem:[%s394 + $0x78] sm:%s386] %v455
                %v457 = vld [vmem:[%s393 + $0xbc] sm:%s386]
                %458 = vst [vmem:[%s394 + $0x7c] sm:%s386] %v457
              $region82: #{tpu_custom_call.1} parent=76 // loop_footer
                %s392 = sadd.s32 1, %s388
              $region83: #{tpu_custom_call.1} parent=76 // loop_footer_branch
                %387 = sbr.rel target = $region79
              $region84: #{tpu_custom_call.1} parent=76 // loop_exit
                _
            $region77: #{tpu_custom_call.1} parent=68 // pred_fallthru
              _
          $region69: #{tpu_custom_call.1} parent=64 // pred_fallthru
            _
          %543 = vnop
        $region65: #{tpu_custom_call.1} parent=15 // pred_fallthru
          _
        // Predicated region
        $region103: #{tpu_custom_call.1} parent=15 // pred_check
          %p544 = pneg %p127
        $region104: #{tpu_custom_call.1} parent=15 // pred_check_branch
          %546 = sbr.rel (%p544) target = $region106
        $region105: #{tpu_custom_call.1} parent=15 // pred_region
          %s547 = sand.u32 %s117, 1
          %s548 = sand.u32 %s117, 1
          %s549 = smul.addr %s548, 8
          %s550 = scalar_lea.vmem [#allocation5], %s549
          %s551 = smul.addr %s21, 4
          %s552 = scalar_lea.vmem %s3, %s551
          // Predicated region
          $region107: #{tpu_custom_call.1} parent=105 // pred_check
            _
          $region108: #{tpu_custom_call.1} parent=105 // pred_check_branch
            %554 = sbr.rel (0) target = $region110
          $region109: #{tpu_custom_call.1} parent=105 // pred_region
            // Predicated region
            $region111: #{tpu_custom_call.1} parent=109 // pred_check
              _
            $region112: #{tpu_custom_call.1} parent=109 // pred_check_branch
              %556 = sbr.rel target = $region114
            $region113: #{tpu_custom_call.1} parent=109 // pred_region
              // Predicated region
              $region126: #{tpu_custom_call.1} parent=113 // pred_check
                _
              $region127: #{tpu_custom_call.1} parent=113 // pred_check_branch
                %574 = sbr.rel (0) target = $region129
              $region128: #{tpu_custom_call.1} parent=113 // pred_region
                loop: start=0, step=1, limit=1
                $region130: #{tpu_custom_call.1} parent=128 // loop_pre_header
                  _
                $region131: #{tpu_custom_call.1} parent=128 // loop_header
                  %s576 = sphi 0, %s580
                  %p577 = scmp.ge.s32.totalorder %s576, 1
                  %s581 = sphi %s552, %s552
                  %s582 = sphi %s550, %s550
                $region132: #{tpu_custom_call.1} parent=128 // loop_header_branch
                  %579 = sbr.rel (%p577) target = $region136
                $region133: #{tpu_custom_call.1} parent=128 // loop_body
                  _
                $region134: #{tpu_custom_call.1} parent=128 // loop_footer
                  %s580 = sadd.s32 1, %s576
                $region135: #{tpu_custom_call.1} parent=128 // loop_footer_branch
                  %575 = sbr.rel target = $region131
                $region136: #{tpu_custom_call.1} parent=128 // loop_exit
                  _
                %s584 = ssub.s32 16, 1
                loop: start=0, step=1, limit=1
                $region137: #{tpu_custom_call.1} parent=128 // loop_pre_header
                  _
                $region138: #{tpu_custom_call.1} parent=128 // loop_header
                  %s586 = sphi 0, %s590
                  %p587 = scmp.ge.s32.totalorder %s586, 1
                  %s591 = sphi %s552, %s552
                  %s592 = sphi %s550, %s550
                $region139: #{tpu_custom_call.1} parent=128 // loop_header_branch
                  %589 = sbr.rel (%p587) target = $region143
                $region140: #{tpu_custom_call.1} parent=128 // loop_body
                  %v593 = vld [vmem:[%s591] sm:%s584]
                  %594 = vst [vmem:[%s592] sm:%s584] %v593
                  %v595 = vld [vmem:[%s591 + $0x8] sm:%s584]
                  %596 = vst [vmem:[%s592 + $0x4] sm:%s584] %v595
                $region141: #{tpu_custom_call.1} parent=128 // loop_footer
                  %s590 = sadd.s32 1, %s586
                $region142: #{tpu_custom_call.1} parent=128 // loop_footer_branch
                  %585 = sbr.rel target = $region138
                $region143: #{tpu_custom_call.1} parent=128 // loop_exit
                  _
              $region129: #{tpu_custom_call.1} parent=113 // pred_fallthru
                _
            $region114: #{tpu_custom_call.1} parent=109 // pred_fallthru
              _
            // Predicated region
            $region115: #{tpu_custom_call.1} parent=109 // pred_check
              _
            $region116: #{tpu_custom_call.1} parent=109 // pred_check_branch
              %558 = sbr.rel (0) target = $region118
            $region117: #{tpu_custom_call.1} parent=109 // pred_region
              %s560 = ssub.s32 16, 1
              loop: start=0, step=1, limit=1
              $region119: #{tpu_custom_call.1} parent=117 // loop_pre_header
                _
              $region120: #{tpu_custom_call.1} parent=117 // loop_header
                %s562 = sphi 0, %s566
                %p563 = scmp.ge.s32.totalorder %s562, 1
                %s567 = sphi %s552, %s552
                %s568 = sphi %s550, %s550
              $region121: #{tpu_custom_call.1} parent=117 // loop_header_branch
                %565 = sbr.rel (%p563) target = $region125
              $region122: #{tpu_custom_call.1} parent=117 // loop_body
                %v569 = vld [vmem:[%s567] sm:%s560]
                %570 = vst [vmem:[%s568] sm:%s560] %v569
                %v571 = vld [vmem:[%s567 + $0x8] sm:%s560]
                %572 = vst [vmem:[%s568 + $0x4] sm:%s560] %v571
              $region123: #{tpu_custom_call.1} parent=117 // loop_footer
                %s566 = sadd.s32 1, %s562
              $region124: #{tpu_custom_call.1} parent=117 // loop_footer_branch
                %561 = sbr.rel target = $region120
              $region125: #{tpu_custom_call.1} parent=117 // loop_exit
                _
            $region118: #{tpu_custom_call.1} parent=109 // pred_fallthru
              _
          $region110: #{tpu_custom_call.1} parent=105 // pred_fallthru
            _
          %597 = vnop
        $region106: #{tpu_custom_call.1} parent=15 // pred_fallthru
          _
      $region16: #{tpu_custom_call.1} parent=5 // pred_fallthru
        _
      %p598 = scmp.le.s32.totalorder 1, %s13
      %p599 = scmp.lt.s32.totalorder %s13, 5
      %p600 = pnand %p598, %p599
      %p601 = pneg %p600
      // Predicated region
      $region144: #{tpu_custom_call.1} parent=5 // pred_check
        _
      $region145: #{tpu_custom_call.1} parent=5 // pred_check_branch
        %603 = sbr.rel (%p600) target = $region147
      $region146: #{tpu_custom_call.1} parent=5 // pred_region
        %s604 = ssub.s32 %s13, 1
        %s605 = sand.u32 %s66, 1
        %s606 = sand.u32 %s66, 1
        %s607 = smul.addr %s606, 128
        %s608 = scalar_lea.vmem [#allocation3], %s607
        // Predicated region
        $region148: #{tpu_custom_call.1} parent=146 // pred_check
          %p609 = pneg %p79
        $region149: #{tpu_custom_call.1} parent=146 // pred_check_branch
          %611 = sbr.rel (%p609) target = $region151
        $region150: #{tpu_custom_call.1} parent=146 // pred_region
          _
        $region151: #{tpu_custom_call.1} parent=146 // pred_fallthru
          _
        %s612 = sand.u32 %s94, 1
        %s613 = sand.u32 %s94, 1
        %s614 = smul.addr %s613, 128
        %s615 = scalar_lea.vmem [#allocation4], %s614
        // Predicated region
        $region152: #{tpu_custom_call.1} parent=146 // pred_check
          %p616 = pneg %p107
        $region153: #{tpu_custom_call.1} parent=146 // pred_check_branch
          %618 = sbr.rel (%p616) target = $region155
        $region154: #{tpu_custom_call.1} parent=146 // pred_region
          _
        $region155: #{tpu_custom_call.1} parent=146 // pred_fallthru
          _
        %s619 = sand.u32 %s120, 1
        %s620 = sand.u32 %s120, 1
        %s621 = smul.addr %s620, 8
        %s622 = scalar_lea.vmem [#allocation5], %s621
        // Predicated region
        $region156: #{tpu_custom_call.1} parent=146 // pred_check
          %p623 = pneg %p133
        $region157: #{tpu_custom_call.1} parent=146 // pred_check_branch
          %625 = sbr.rel (%p623) target = $region159
        $region158: #{tpu_custom_call.1} parent=146 // pred_region
          _
        $region159: #{tpu_custom_call.1} parent=146 // pred_fallthru
          _
        %s626 = smul.u32 2, %s22
        %p627 = scmp.lt.s32.totalorder %s626, 3
        %s628 = scalar_select %p627, %s626, 3
        %s629 = smul.addr %s628, 2
        %s630 = smul.addr %s629, 8
        %s631 = scalar_lea.vmem %s0, %s630
        %p632 = pneg %p51
        %p633 = pneg %p48
        %s634 = sand.u32 %s66, 1
        %s635 = sand.u32 %s66, 1
        %s636 = smul.addr %s635, 128
        %s637 = scalar_lea.vmem [#allocation3], %s636
        %p638 = pneg %p79
        %p639 = pneg %p76
        %s640 = sand.u32 %s94, 1
        %s641 = sand.u32 %s94, 1
        %s642 = smul.addr %s641, 128
        %s643 = scalar_lea.vmem [#allocation4], %s642
        %p644 = pneg %p107
        %p645 = pneg %p104
        %s646 = sand.u32 %s120, 1
        %s647 = sand.u32 %s120, 1
        %s648 = smul.addr %s647, 8
        %s649 = scalar_lea.vmem [#allocation5], %s648
        %p650 = pneg %p133
        %p651 = pneg %p130
        %p652 = pneg %p159
        %p653 = pneg %p156
        %s654 = sand.u32 %s146, 1
        %s655 = scalar_lea.sflag [#allocation7], %s654
        %s656 = sand.u32 %s146, 1
        %s657 = smul.addr %s656, 32
        %s658 = scalar_lea.vmem [#allocation6], %s657
        %s659 = smul.u32 2, %s22
        %p660 = scmp.lt.s32.totalorder %s659, 3
        %s661 = scalar_select %p660, %s659, 3
        %s662 = smul.addr %s661, 2
        %s663 = smul.addr %s662, 8
        %s664 = scalar_lea.vmem %s0, %s663
        %s665 = smul.u32 2, %s22
        %s666 = smul.u32 2, %s22
        %s667 = smul.u32 16, %s23
        %s668 = smul.u32 2, %s22
        %s669 = smul.u32 16, %s23
        %s670 = smul.u32 2, %s22
        %p672 = scmp.eq.s32.totalorder %s23, 0
        // Predicated region
        $region160: #{tpu_custom_call.1} parent=146 // pred_check
          %p673 = pneg %p672
        $region161: #{tpu_custom_call.1} parent=146 // pred_check_branch
          %675 = sbr.rel (%p673) target = $region163
        $region162: #{tpu_custom_call.1} parent=146 // pred_region
          %vm676 = vcmask 261120
          %677 = vst.msk [vmem:[%s658] sm:$0xff] %vm676, 0.0
          %678 = vst.msk [vmem:[%s658 + $0x8] sm:$0xff] %vm676, 0.0
          %679 = vst.msk [vmem:[%s658 + $0x10] sm:$0xff] %vm676, 0.0
          %680 = vst.msk [vmem:[%s658 + $0x18] sm:$0xff] %vm676, 0.0
          %v681 = vld [vmem:[%s664] sm:$0xff]
          %v682 = vld [vmem:[%s664 + $0x8] sm:$0xff]
          %v683 = vld [vmem:[%s664 + $0x10] sm:$0xff]
          %v684 = vld [vmem:[%s664 + $0x18] sm:$0xff]
          %v685 = vmul.f32 %v681, 0.125
          %v686 = vmul.f32 %v682, 0.125
          %v687 = vmul.f32 %v683, 0.125
          %v688 = vmul.f32 %v684, 0.125
          %v689 = vpack.c.bf16 %v686, %v685
          %v690 = vpack.c.bf16 %v688, %v687
          %v693 = vunpack.c.l.b16 %v689
          %v694 = vunpack.c.h.b16 %v689
          %v695 = vunpack.c.l.b16 %v690
          %v696 = vunpack.c.h.b16 %v690
          %v697 = vpack.c.b16 %v693, %v693
          %v698 = vpack.c.b16 %v694, %v694
          %v699 = vpack.c.b16 %v695, %v695
          %v700 = vpack.c.b16 %v696, %v696
          %vm705 = vcmask 519168
          %706 = vst.msk [vmem:[#allocation2] sm:$0xf] %vm705, %v697
          %707 = vst.msk [vmem:[#allocation2 + $0x4] sm:$0xf] %vm705, %v698
          %708 = vst.msk [vmem:[#allocation2 + $0x8] sm:$0xf] %vm705, %v699
          %709 = vst.msk [vmem:[#allocation2 + $0xc] sm:$0xf] %vm705, %v700
        $region163: #{tpu_custom_call.1} parent=146 // pred_fallthru
          _
        %v710 = vld [vmem:[#allocation2] sm:$0xf]
        %v711 = vld [vmem:[#allocation2 + $0x4] sm:$0xf]
        %v712 = vld [vmem:[#allocation2 + $0x8] sm:$0xf]
        %v713 = vld [vmem:[#allocation2 + $0xc] sm:$0xf]
        %v714 = vld [vmem:[%s608] sm:$0xf]
        %v715 = vld [vmem:[%s608 + $0x4] sm:$0xf]
        %v716 = vld [vmem:[%s608 + $0x8] sm:$0xf]
        %v717 = vld [vmem:[%s608 + $0xc] sm:$0xf]
        %v718 = vld [vmem:[%s608 + $0x10] sm:$0xf]
        %v719 = vld [vmem:[%s608 + $0x14] sm:$0xf]
        %v720 = vld [vmem:[%s608 + $0x18] sm:$0xf]
        %v721 = vld [vmem:[%s608 + $0x1c] sm:$0xf]
        %v722 = vld [vmem:[%s608 + $0x20] sm:$0xf]
        %v723 = vld [vmem:[%s608 + $0x24] sm:$0xf]
        %v724 = vld [vmem:[%s608 + $0x28] sm:$0xf]
        %v725 = vld [vmem:[%s608 + $0x2c] sm:$0xf]
        %v726 = vld [vmem:[%s608 + $0x30] sm:$0xf]
        %v727 = vld [vmem:[%s608 + $0x34] sm:$0xf]
        %v728 = vld [vmem:[%s608 + $0x38] sm:$0xf]
        %v729 = vld [vmem:[%s608 + $0x3c] sm:$0xf]
        %v730 = vld [vmem:[%s608 + $0x40] sm:$0xf]
        %v731 = vld [vmem:[%s608 + $0x44] sm:$0xf]
        %v732 = vld [vmem:[%s608 + $0x48] sm:$0xf]
        %v733 = vld [vmem:[%s608 + $0x4c] sm:$0xf]
        %v734 = vld [vmem:[%s608 + $0x50] sm:$0xf]
        %v735 = vld [vmem:[%s608 + $0x54] sm:$0xf]
        %v736 = vld [vmem:[%s608 + $0x58] sm:$0xf]
        %v737 = vld [vmem:[%s608 + $0x5c] sm:$0xf]
        %v738 = vld [vmem:[%s608 + $0x60] sm:$0xf]
        %v739 = vld [vmem:[%s608 + $0x64] sm:$0xf]
        %v740 = vld [vmem:[%s608 + $0x68] sm:$0xf]
        %v741 = vld [vmem:[%s608 + $0x6c] sm:$0xf]
        %v742 = vld [vmem:[%s608 + $0x70] sm:$0xf]
        %v743 = vld [vmem:[%s608 + $0x74] sm:$0xf]
        %v744 = vld [vmem:[%s608 + $0x78] sm:$0xf]
        %v745 = vld [vmem:[%s608 + $0x7c] sm:$0xf]
        %v746 = vld [vmem:[%s615] sm:$0xf]
        %v747 = vld [vmem:[%s615 + $0x4] sm:$0xf]
        %v748 = vld [vmem:[%s615 + $0x8] sm:$0xf]
        %v749 = vld [vmem:[%s615 + $0xc] sm:$0xf]
        %v750 = vld [vmem:[%s615 + $0x10] sm:$0xf]
        %v751 = vld [vmem:[%s615 + $0x14] sm:$0xf]
        %v752 = vld [vmem:[%s615 + $0x18] sm:$0xf]
        %v753 = vld [vmem:[%s615 + $0x1c] sm:$0xf]
        %v754 = vld [vmem:[%s615 + $0x20] sm:$0xf]
        %v755 = vld [vmem:[%s615 + $0x24] sm:$0xf]
        %v756 = vld [vmem:[%s615 + $0x28] sm:$0xf]
        %v757 = vld [vmem:[%s615 + $0x2c] sm:$0xf]
        %v758 = vld [vmem:[%s615 + $0x30] sm:$0xf]
        %v759 = vld [vmem:[%s615 + $0x34] sm:$0xf]
        %v760 = vld [vmem:[%s615 + $0x38] sm:$0xf]
        %v761 = vld [vmem:[%s615 + $0x3c] sm:$0xf]
        %v762 = vld [vmem:[%s615 + $0x40] sm:$0xf]
        %v763 = vld [vmem:[%s615 + $0x44] sm:$0xf]
        %v764 = vld [vmem:[%s615 + $0x48] sm:$0xf]
        %v765 = vld [vmem:[%s615 + $0x4c] sm:$0xf]
        %v766 = vld [vmem:[%s615 + $0x50] sm:$0xf]
        %v767 = vld [vmem:[%s615 + $0x54] sm:$0xf]
        %v768 = vld [vmem:[%s615 + $0x58] sm:$0xf]
        %v769 = vld [vmem:[%s615 + $0x5c] sm:$0xf]
        %v770 = vld [vmem:[%s615 + $0x60] sm:$0xf]
        %v771 = vld [vmem:[%s615 + $0x64] sm:$0xf]
        %v772 = vld [vmem:[%s615 + $0x68] sm:$0xf]
        %v773 = vld [vmem:[%s615 + $0x6c] sm:$0xf]
        %v774 = vld [vmem:[%s615 + $0x70] sm:$0xf]
        %v775 = vld [vmem:[%s615 + $0x74] sm:$0xf]
        %v776 = vld [vmem:[%s615 + $0x78] sm:$0xf]
        %v777 = vld [vmem:[%s615 + $0x7c] sm:$0xf]
        %v778 = vld [vmem:[%s622] sm:$0xf]
        %v779 = vld [vmem:[%s622 + $0x4] sm:$0xf]
        %v780 = vunpack.c.l.bf16 %v778
        %v781 = vunpack.c.l.bf16 %v779
        %v784 = vunpack.c.l.b16 %v710
        %v785 = vunpack.c.l.b16 %v711
        %v786 = vpack.c.b16 %v785, %v784
        %v803 = vunpack.c.l.b16 %v714
        %v804 = vunpack.c.l.b16 %v715
        %v805 = vunpack.c.l.b16 %v716
        %v806 = vunpack.c.l.b16 %v717
        %v807 = vunpack.c.l.b16 %v718
        %v808 = vunpack.c.l.b16 %v719
        %v809 = vunpack.c.l.b16 %v720
        %v810 = vunpack.c.l.b16 %v721
        %v811 = vunpack.c.l.b16 %v722
        %v812 = vunpack.c.l.b16 %v723
        %v813 = vunpack.c.l.b16 %v724
        %v814 = vunpack.c.l.b16 %v725
        %v815 = vunpack.c.l.b16 %v726
        %v816 = vunpack.c.l.b16 %v727
        %v817 = vunpack.c.l.b16 %v728
        %v818 = vunpack.c.l.b16 %v729
        %v819 = vpack.c.b16 %v804, %v803
        %v820 = vpack.c.b16 %v806, %v805
        %v821 = vpack.c.b16 %v808, %v807
        %v822 = vpack.c.b16 %v810, %v809
        %v823 = vpack.c.b16 %v812, %v811
        %v824 = vpack.c.b16 %v814, %v813
        %v825 = vpack.c.b16 %v816, %v815
        %v826 = vpack.c.b16 %v818, %v817
        %vm827 = vcmask 523264
        %v829 = vsel %vm827, %v786, 0
        %v832 = vsel %vm827, %v819, 0
        %v835 = vsel %vm827, %v820, 0
        %v838 = vsel %vm827, %v821, 0
        %v841 = vsel %vm827, %v822, 0
        %v844 = vsel %vm827, %v823, 0
        %v847 = vsel %vm827, %v824, 0
        %v850 = vsel %vm827, %v825, 0
        %v853 = vsel %vm827, %v826, 0
        %855 = vmatprep.subr.bf16.mxu0 0
        %856 = vmatpush1.bf16.xpose.msra.mxu0 %v853
        %857 = vmatprep.subr.bf16.mxu0 0
        %858 = vmatpush1.bf16.xpose.msra.mxu0 %v850
        %859 = vmatprep.subr.bf16.mxu0 0
        %860 = vmatpush1.bf16.xpose.msra.mxu0 %v847
        %861 = vmatprep.subr.bf16.mxu0 0
        %862 = vmatpush1.bf16.xpose.msra.mxu0 %v844
        %863 = vmatprep.subr.bf16.mxu0 0
        %864 = vmatpush1.bf16.xpose.msra.mxu0 %v841
        %865 = vmatprep.subr.bf16.mxu0 0
        %866 = vmatpush1.bf16.xpose.msra.mxu0 %v838
        %867 = vmatprep.subr.bf16.mxu0 0
        %868 = vmatpush1.bf16.xpose.msra.mxu0 %v835
        %869 = vmatprep.subr.bf16.mxu0 0
        %870 = vmatpush1.bf16.xpose.msra.mxu0 %v832
        %871 = vmatprep.subr.bf16.mxu0 0
        %872 = vmatpush2.bf16.xpose.msra.mxu0 0
        %873 = vmatprep.subr.bf16.mxu0 0
        %874 = vmatpush2.bf16.xpose.msra.mxu0 0
        %875 = vmatprep.subr.bf16.mxu0 0
        %876 = vmatpush2.bf16.xpose.msra.mxu0 0
        %877 = vmatprep.subr.bf16.mxu0 0
        %878 = vmatpush2.bf16.xpose.msra.mxu0 0
        %879 = vmatprep.subr.bf16.mxu0 0
        %880 = vmatpush2.bf16.xpose.msra.mxu0 0
        %881 = vmatprep.subr.bf16.mxu0 0
        %882 = vmatpush2.bf16.xpose.msra.mxu0 0
        %883 = vmatprep.subr.bf16.mxu0 0
        %884 = vmatpush2.bf16.xpose.msra.mxu0 0
        %885 = vmatprep.subr.bf16.mxu0 0
        %886 = vmatpush2.bf16.xpose.msra.mxu0 0
        %887 = vmatprep.mubr.bf16.mxu0 0
        %888 = vmatmul.mubr.bf16.gmra.mxu0 %v829
        %v889 = vpop.f32.mrf.mxu0
        %v890 = vadd.f32 %v780, %v889
        %v891 = vpop.f32.mrf.mxu0
        %v892 = vpop.f32.mrf.mxu0
        %v893 = vadd.f32 %v781, %v892
        %v894 = vpop.f32.mrf.mxu0
        %895 = vdwg.mxu0
        %v898 = vunpack.c.l.b16 %v712
        %v899 = vunpack.c.l.b16 %v713
        %v900 = vpack.c.b16 %v899, %v898
        %v917 = vunpack.c.l.b16 %v730
        %v918 = vunpack.c.l.b16 %v731
        %v919 = vunpack.c.l.b16 %v732
        %v920 = vunpack.c.l.b16 %v733
        %v921 = vunpack.c.l.b16 %v734
        %v922 = vunpack.c.l.b16 %v735
        %v923 = vunpack.c.l.b16 %v736
        %v924 = vunpack.c.l.b16 %v737
        %v925 = vunpack.c.l.b16 %v738
        %v926 = vunpack.c.l.b16 %v739
        %v927 = vunpack.c.l.b16 %v740
        %v928 = vunpack.c.l.b16 %v741
        %v929 = vunpack.c.l.b16 %v742
        %v930 = vunpack.c.l.b16 %v743
        %v931 = vunpack.c.l.b16 %v744
        %v932 = vunpack.c.l.b16 %v745
        %v933 = vpack.c.b16 %v918, %v917
        %v934 = vpack.c.b16 %v920, %v919
        %v935 = vpack.c.b16 %v922, %v921
        %v936 = vpack.c.b16 %v924, %v923
        %v937 = vpack.c.b16 %v926, %v925
        %v938 = vpack.c.b16 %v928, %v927
        %v939 = vpack.c.b16 %v930, %v929
        %v940 = vpack.c.b16 %v932, %v931
        %v942 = vsel %vm827, %v900, 0
        %v945 = vsel %vm827, %v933, 0
        %v948 = vsel %vm827, %v934, 0
        %v951 = vsel %vm827, %v935, 0
        %v954 = vsel %vm827, %v936, 0
        %v957 = vsel %vm827, %v937, 0
        %v960 = vsel %vm827, %v938, 0
        %v963 = vsel %vm827, %v939, 0
        %v966 = vsel %vm827, %v940, 0
        %968 = vmatprep.subr.bf16.mxu0 0
        %969 = vmatpush1.bf16.xpose.msra.mxu0 %v966
        %970 = vmatprep.subr.bf16.mxu0 0
        %971 = vmatpush1.bf16.xpose.msra.mxu0 %v963
        %972 = vmatprep.subr.bf16.mxu0 0
        %973 = vmatpush1.bf16.xpose.msra.mxu0 %v960
        %974 = vmatprep.subr.bf16.mxu0 0
        %975 = vmatpush1.bf16.xpose.msra.mxu0 %v957
        %976 = vmatprep.subr.bf16.mxu0 0
        %977 = vmatpush1.bf16.xpose.msra.mxu0 %v954
        %978 = vmatprep.subr.bf16.mxu0 0
        %979 = vmatpush1.bf16.xpose.msra.mxu0 %v951
        %980 = vmatprep.subr.bf16.mxu0 0
        %981 = vmatpush1.bf16.xpose.msra.mxu0 %v948
        %982 = vmatprep.subr.bf16.mxu0 0
        %983 = vmatpush1.bf16.xpose.msra.mxu0 %v945
        %984 = vmatprep.subr.bf16.mxu0 0
        %985 = vmatpush2.bf16.xpose.msra.mxu0 0
        %986 = vmatprep.subr.bf16.mxu0 0
        %987 = vmatpush2.bf16.xpose.msra.mxu0 0
        %988 = vmatprep.subr.bf16.mxu0 0
        %989 = vmatpush2.bf16.xpose.msra.mxu0 0
        %990 = vmatprep.subr.bf16.mxu0 0
        %991 = vmatpush2.bf16.xpose.msra.mxu0 0
        %992 = vmatprep.subr.bf16.mxu0 0
        %993 = vmatpush2.bf16.xpose.msra.mxu0 0
        %994 = vmatprep.subr.bf16.mxu0 0
        %995 = vmatpush2.bf16.xpose.msra.mxu0 0
        %996 = vmatprep.subr.bf16.mxu0 0
        %997 = vmatpush2.bf16.xpose.msra.mxu0 0
        %998 = vmatprep.subr.bf16.mxu0 0
        %999 = vmatpush2.bf16.xpose.msra.mxu0 0
        %1000 = vmatprep.mubr.bf16.mxu0 0
        %1001 = vmatmul.mubr.bf16.gmra.mxu0 %v942
        %v1002 = vpop.f32.mrf.mxu0
        %v1003 = vadd.f32 %v780, %v1002
        %v1004 = vpop.f32.mrf.mxu0
        %v1005 = vpop.f32.mrf.mxu0
        %v1006 = vadd.f32 %v781, %v1005
        %v1007 = vpop.f32.mrf.mxu0
        %1008 = vdwg.mxu0
        %v1009 = vmax.f32 %v890, %v893
        %v1010 = vrot.slane %v1009, 4
        %v1011 = vmax.f32 %v1009, %v1010
        %v1012 = vrot.slane %v1011, 2
        %v1013 = vmax.f32 %v1011, %v1012
        %v1014 = vrot.slane %v1013, 1
        %v1015 = vmax.f32 %v1013, %v1014
        %v1016 = vmax.f32 %v1003, %v1006
        %v1017 = vrot.slane %v1016, 4
        %v1018 = vmax.f32 %v1016, %v1017
        %v1019 = vrot.slane %v1018, 2
        %v1020 = vmax.f32 %v1018, %v1019
        %v1021 = vrot.slane %v1020, 1
        %v1022 = vmax.f32 %v1020, %v1021
        %v1023 = vsub.f32 %v890, %v1015
        %v1024 = vsub.f32 %v893, %v1015
        %v1025 = vsub.f32 %v1003, %v1022
        %v1026 = vsub.f32 %v1006, %v1022
        %v1027 = vmul.f32 %v1023, 1.442695
        %v1028 = vpow.pop %v1027
        %v1029 = vmul.f32 %v1024, 1.442695
        %v1030 = vpow.pop %v1029
        %v1031 = vmul.f32 %v1025, 1.442695
        %v1032 = vpow.pop %v1031
        %v1033 = vmul.f32 %v1026, 1.442695
        %v1034 = vpow.pop %v1033
        %v1035 = vadd.f32 %v1028, %v1030
        %v1036 = vrot.slane %v1035, 4
        %v1037 = vadd.f32 %v1035, %v1036
        %v1038 = vrot.slane %v1037, 2
        %v1039 = vadd.f32 %v1037, %v1038
        %v1040 = vrot.slane %v1039, 1
        %v1041 = vadd.f32 %v1039, %v1040
        %v1042 = vadd.f32 %v1032, %v1034
        %v1043 = vrot.slane %v1042, 4
        %v1044 = vadd.f32 %v1042, %v1043
        %v1045 = vrot.slane %v1044, 2
        %v1046 = vadd.f32 %v1044, %v1045
        %v1047 = vrot.slane %v1046, 1
        %v1048 = vadd.f32 %v1046, %v1047
        %v1049 = vrcp.pop %v1041
        %v1050 = vrcp.pop %v1048
        %v1051 = vmul.f32 %v1028, %v1049
        %v1052 = vmul.f32 %v1030, %v1049
        %v1053 = vmul.f32 %v1032, %v1050
        %v1054 = vmul.f32 %v1034, %v1050
        %v1055 = vpack.c.bf16 %v1052, %v1051
        %v1056 = vpack.c.bf16 %v1054, %v1053
        %v1057 = vld [vmem:[%s658] sm:$0xff]
        %v1058 = vld [vmem:[%s658 + $0x8] sm:$0xff]
        %v1059 = vld [vmem:[%s658 + $0x10] sm:$0xff]
        %v1060 = vld [vmem:[%s658 + $0x18] sm:$0xff]
        %v1077 = vunpack.c.l.b16 %v746
        %v1078 = vunpack.c.l.b16 %v747
        %v1079 = vunpack.c.l.b16 %v748
        %v1080 = vunpack.c.l.b16 %v749
        %v1081 = vunpack.c.l.b16 %v750
        %v1082 = vunpack.c.l.b16 %v751
        %v1083 = vunpack.c.l.b16 %v752
        %v1084 = vunpack.c.l.b16 %v753
        %v1085 = vunpack.c.l.b16 %v754
        %v1086 = vunpack.c.l.b16 %v755
        %v1087 = vunpack.c.l.b16 %v756
        %v1088 = vunpack.c.l.b16 %v757
        %v1089 = vunpack.c.l.b16 %v758
        %v1090 = vunpack.c.l.b16 %v759
        %v1091 = vunpack.c.l.b16 %v760
        %v1092 = vunpack.c.l.b16 %v761
        %v1093 = vpack.c.b16 %v1078, %v1077
        %v1094 = vpack.c.b16 %v1080, %v1079
        %v1095 = vpack.c.b16 %v1082, %v1081
        %v1096 = vpack.c.b16 %v1084, %v1083
        %v1097 = vpack.c.b16 %v1086, %v1085
        %v1098 = vpack.c.b16 %v1088, %v1087
        %v1099 = vpack.c.b16 %v1090, %v1089
        %v1100 = vpack.c.b16 %v1092, %v1091
        %1109 = vmatprep.subr.bf16.mxu0 0
        %1110 = vmatpush1.bf16.msra.mxu0 %v1100
        %1111 = vmatprep.subr.bf16.mxu0 0
        %1112 = vmatpush1.bf16.msra.mxu0 %v1099
        %1113 = vmatprep.subr.bf16.mxu0 0
        %1114 = vmatpush1.bf16.msra.mxu0 %v1098
        %1115 = vmatprep.subr.bf16.mxu0 0
        %1116 = vmatpush1.bf16.msra.mxu0 %v1097
        %1117 = vmatprep.subr.bf16.mxu0 0
        %1118 = vmatpush1.bf16.msra.mxu0 %v1096
        %1119 = vmatprep.subr.bf16.mxu0 0
        %1120 = vmatpush1.bf16.msra.mxu0 %v1095
        %1121 = vmatprep.subr.bf16.mxu0 0
        %1122 = vmatpush1.bf16.msra.mxu0 %v1094
        %1123 = vmatprep.subr.bf16.mxu0 0
        %1124 = vmatpush1.bf16.msra.mxu0 %v1093
        %1125 = vmatprep.subr.bf16.mxu0 0
        %1126 = vmatpush2.bf16.msra.mxu0 0
        %1127 = vmatprep.subr.bf16.mxu0 0
        %1128 = vmatpush2.bf16.msra.mxu0 0
        %1129 = vmatprep.subr.bf16.mxu0 0
        %1130 = vmatpush2.bf16.msra.mxu0 0
        %1131 = vmatprep.subr.bf16.mxu0 0
        %1132 = vmatpush2.bf16.msra.mxu0 0
        %1133 = vmatprep.subr.bf16.mxu0 0
        %1134 = vmatpush2.bf16.msra.mxu0 0
        %1135 = vmatprep.subr.bf16.mxu0 0
        %1136 = vmatpush2.bf16.msra.mxu0 0
        %1137 = vmatprep.subr.bf16.mxu0 0
        %1138 = vmatpush2.bf16.msra.mxu0 0
        %1139 = vmatprep.subr.bf16.mxu0 0
        %1140 = vmatpush2.bf16.msra.mxu0 0
        %1141 = vmatprep.mubr.bf16.mxu0 0
        %1142 = vmatmul.mubr.bf16.gmra.mxu0 %v1055
        %v1143 = vpop.f32.mrf.mxu0
        %v1144 = vadd.f32 0.0, %v1143
        %v1145 = vpop.f32.mrf.mxu0
        %v1146 = vpop.f32.mrf.mxu0
        %v1147 = vadd.f32 0.0, %v1146
        %v1148 = vpop.f32.mrf.mxu0
        %1149 = vdwg.mxu0
        %v1166 = vunpack.c.l.b16 %v762
        %v1167 = vunpack.c.l.b16 %v763
        %v1168 = vunpack.c.l.b16 %v764
        %v1169 = vunpack.c.l.b16 %v765
        %v1170 = vunpack.c.l.b16 %v766
        %v1171 = vunpack.c.l.b16 %v767
        %v1172 = vunpack.c.l.b16 %v768
        %v1173 = vunpack.c.l.b16 %v769
        %v1174 = vunpack.c.l.b16 %v770
        %v1175 = vunpack.c.l.b16 %v771
        %v1176 = vunpack.c.l.b16 %v772
        %v1177 = vunpack.c.l.b16 %v773
        %v1178 = vunpack.c.l.b16 %v774
        %v1179 = vunpack.c.l.b16 %v775
        %v1180 = vunpack.c.l.b16 %v776
        %v1181 = vunpack.c.l.b16 %v777
        %v1182 = vpack.c.b16 %v1167, %v1166
        %v1183 = vpack.c.b16 %v1169, %v1168
        %v1184 = vpack.c.b16 %v1171, %v1170
        %v1185 = vpack.c.b16 %v1173, %v1172
        %v1186 = vpack.c.b16 %v1175, %v1174
        %v1187 = vpack.c.b16 %v1177, %v1176
        %v1188 = vpack.c.b16 %v1179, %v1178
        %v1189 = vpack.c.b16 %v1181, %v1180
        %1198 = vmatprep.subr.bf16.mxu0 0
        %1199 = vmatpush1.bf16.msra.mxu0 %v1189
        %1200 = vmatprep.subr.bf16.mxu0 0
        %1201 = vmatpush1.bf16.msra.mxu0 %v1188
        %1202 = vmatprep.subr.bf16.mxu0 0
        %1203 = vmatpush1.bf16.msra.mxu0 %v1187
        %1204 = vmatprep.subr.bf16.mxu0 0
        %1205 = vmatpush1.bf16.msra.mxu0 %v1186
        %1206 = vmatprep.subr.bf16.mxu0 0
        %1207 = vmatpush1.bf16.msra.mxu0 %v1185
        %1208 = vmatprep.subr.bf16.mxu0 0
        %1209 = vmatpush1.bf16.msra.mxu0 %v1184
        %1210 = vmatprep.subr.bf16.mxu0 0
        %1211 = vmatpush1.bf16.msra.mxu0 %v1183
        %1212 = vmatprep.subr.bf16.mxu0 0
        %1213 = vmatpush1.bf16.msra.mxu0 %v1182
        %1214 = vmatprep.subr.bf16.mxu0 0
        %1215 = vmatpush2.bf16.msra.mxu0 0
        %1216 = vmatprep.subr.bf16.mxu0 0
        %1217 = vmatpush2.bf16.msra.mxu0 0
        %1218 = vmatprep.subr.bf16.mxu0 0
        %1219 = vmatpush2.bf16.msra.mxu0 0
        %1220 = vmatprep.subr.bf16.mxu0 0
        %1221 = vmatpush2.bf16.msra.mxu0 0
        %1222 = vmatprep.subr.bf16.mxu0 0
        %1223 = vmatpush2.bf16.msra.mxu0 0
        %1224 = vmatprep.subr.bf16.mxu0 0
        %1225 = vmatpush2.bf16.msra.mxu0 0
        %1226 = vmatprep.subr.bf16.mxu0 0
        %1227 = vmatpush2.bf16.msra.mxu0 0
        %1228 = vmatprep.subr.bf16.mxu0 0
        %1229 = vmatpush2.bf16.msra.mxu0 0
        %1230 = vmatprep.mubr.bf16.mxu0 0
        %1231 = vmatmul.mubr.bf16.gmra.mxu0 %v1056
        %v1232 = vpop.f32.mrf.mxu0
        %v1233 = vadd.f32 0.0, %v1232
        %v1234 = vpop.f32.mrf.mxu0
        %v1235 = vpop.f32.mrf.mxu0
        %v1236 = vadd.f32 0.0, %v1235
        %v1237 = vpop.f32.mrf.mxu0
        %1238 = vdwg.mxu0
        %v1239 = vadd.f32 %v1057, %v1144
        %v1240 = vadd.f32 %v1058, %v1147
        %v1241 = vadd.f32 %v1059, %v1233
        %v1242 = vadd.f32 %v1060, %v1236
        %vm1243 = vcmask 261120
        %1244 = vst.msk [vmem:[%s658] sm:$0xff] %vm1243, %v1239
        %1245 = vst.msk [vmem:[%s658 + $0x8] sm:$0xff] %vm1243, %v1240
        %1246 = vst.msk [vmem:[%s658 + $0x10] sm:$0xff] %vm1243, %v1241
        %1247 = vst.msk [vmem:[%s658 + $0x18] sm:$0xff] %vm1243, %v1242
        %s1248 = sand.u32 %s146, 1
        %s1249 = scalar_lea.sflag [#allocation7], %s1248
        %s1250 = sand.u32 %s146, 1
        %s1251 = smul.addr %s1250, 32
        %s1252 = scalar_lea.vmem [#allocation6], %s1251
        // Predicated region
        $region164: #{tpu_custom_call.1} parent=146 // pred_check
          %p1253 = pneg %p156
        $region165: #{tpu_custom_call.1} parent=146 // pred_check_branch
          %1255 = sbr.rel (%p1253) target = $region167
        $region166: #{tpu_custom_call.1} parent=146 // pred_region
          %s1256 = smul.u32 2, %s22
          %s1258 = ssub.s32 512, 512
          %1259 = vsyncadd %s1249, %s1258
          %s1260 = smul.addr %s1256, 2
          %s1261 = smul.addr %s1260, 128
          %s1262 = scalar_lea.hbm %s4, %s1261
          %s1263 = sshll.u32 %s1252, 4
          %s1264 = int_to_ptr.vmem [resolvable:$true] %s1263
          %1269 = dma.vmem_to_hbm [thread:$0]  %s1264, 512, %s1262, %s1249, 128, 128, 8
        $region167: #{tpu_custom_call.1} parent=146 // pred_fallthru
          _
      $region147: #{tpu_custom_call.1} parent=5 // pred_fallthru
        _
      %p1270 = scmp.le.s32.totalorder 2, %s13
      // Predicated region
      $region168: #{tpu_custom_call.1} parent=5 // pred_check
        %p1271 = pneg %p1270
      $region169: #{tpu_custom_call.1} parent=5 // pred_check_branch
        %1273 = sbr.rel (%p1271) target = $region171
      $region170: #{tpu_custom_call.1} parent=5 // pred_region
        %s1274 = ssub.s32 %s13, 2
        // Predicated region
        $region172: #{tpu_custom_call.1} parent=170 // pred_check
          %p1275 = pneg %p162
        $region173: #{tpu_custom_call.1} parent=170 // pred_check_branch
          %1277 = sbr.rel (%p1275) target = $region175
        $region174: #{tpu_custom_call.1} parent=170 // pred_region
          %s1278 = sand.u32 %s147, 1
          %s1279 = scalar_lea.sflag [#allocation7], %s1278
          %s1280 = sand.u32 %s147, 1
          %s1281 = smul.addr %s1280, 32
          %s1282 = scalar_lea.vmem [#allocation6], %s1281
          %1283 = dma.done %s1279, 512
        $region175: #{tpu_custom_call.1} parent=170 // pred_fallthru
          _
      $region171: #{tpu_custom_call.1} parent=5 // pred_fallthru
        _
    $region6: #{tpu_custom_call.1} parent=1 // loop_footer
      %s17 = sadd.s32 1, %s13
    $region7: #{tpu_custom_call.1} parent=1 // loop_footer_branch
      %12 = sbr.rel target = $region3
    $region8: #{tpu_custom_call.1} parent=1 // loop_exit
      _
    %1284 = vsyncpa [#allocation7], 1
    %s1285 = scalar_lea.sflag [#allocation7], 1
    %1286 = vsyncpa %s1285, 1

</llo_original>
